<compile_context>
chip_gen: v5e
topology: v5e:2x2
jax: 0.10.0
libtpu: 0.0.40
codegen_flags: <defaults>
</compile_context>

<pallas_src>
import functools
import math

import jax
import jax.numpy as jnp
from jax.experimental import pallas as pl
from jax.experimental.pallas import tpu as pltpu


def _layernorm(x, gamma, beta, eps=1e-5):
    # x: (M, E) f32 ; gamma/beta: (1, E) f32
    mu = jnp.mean(x, axis=-1, keepdims=True)
    xc = x - mu
    var = jnp.mean(xc * xc, axis=-1, keepdims=True)
    return xc * jax.lax.rsqrt(var + eps) * gamma + beta


def encoder_layer_kernel(
    x_ref,      # (Nb, L, E)   activations (compute/operand dtype: f32 or bf16)
    wqkv_ref,   # (E, 3E)      pre-transposed packed q/k/v projection weight
    wo_ref,     # (E, E)       pre-transposed out_proj weight
    w1_ref,     # (E, F)       pre-transposed l1 weight
    w2_ref,     # (F, E)       pre-transposed l2 weight
    bqkv_ref,   # (1, 3E)      packed q/k/v bias
    b1_ref,     # (1, F)       l1 bias
    vecs_ref,   # (6, E)       rows: out_b, ln1_g, ln1_b, b2, ln2_g, ln2_b
    o_ref,      # (Nb, L, E)
    *,
    nhead,
):
    Nb, L, E = x_ref.shape
    M = Nb * L
    Dh = E // nhead
    scale = 1.0 / math.sqrt(Dh)
    cdt = x_ref.dtype              # MXU operand dtype (bf16 weights -> bf16 MXU)

    x = x_ref[...].reshape(M, E)                     # operand dtype, (M, E)
    x_f32 = x.astype(jnp.float32)

    vecs = vecs_ref[...].astype(jnp.float32)         # small, one cast
    out_b, ln1_g, ln1_b = vecs[0:1], vecs[1:2], vecs[2:3]
    b2, ln2_g, ln2_b = vecs[3:4], vecs[4:5], vecs[5:6]

    # --- self attention (q = k = v = x since pos=None) ------------------------
    # Fused q/k/v projection: one (M,E)@(E,3E) MXU matmul, f32 accumulation.
    qkv = (jnp.dot(x, wqkv_ref[...], preferred_element_type=jnp.float32)
           + bqkv_ref[...].astype(jnp.float32))      # (M, 3E) f32
    qkv = qkv.reshape(Nb, L, 3 * E)

    wo = wo_ref[...]                                 # (E, E), storage dtype
    attn = jnp.zeros((M, E), jnp.float32)
    # Static head loop (nhead small). Heads are batched over Nb via leading-
    # batch einsums; the concat is replaced by accumulating the out-projection
    # of each head, so no lane-shuffle concat and no live list of head outputs.
    for h in range(nhead):
        q_h = (qkv[:, :, h * Dh:(h + 1) * Dh] * scale).astype(cdt)       # (Nb,L,Dh)
        k_h = qkv[:, :, E + h * Dh:E + (h + 1) * Dh].astype(cdt)
        v_h = qkv[:, :, 2 * E + h * Dh:2 * E + (h + 1) * Dh].astype(cdt)
        s = jnp.einsum("bld,bmd->blm", q_h, k_h,
                       preferred_element_type=jnp.float32)               # (Nb,L,L)
        s = s - jnp.max(s, axis=-1, keepdims=True)
        p = jnp.exp(s)                                                    # f32
        p = p * pl.reciprocal(jnp.sum(p, axis=-1, keepdims=True), approx=True)
        o_h = jnp.einsum("blm,bmd->bld", p.astype(cdt), v_h,
                         preferred_element_type=jnp.float32)              # (Nb,L,Dh)
        attn = attn + jnp.dot(o_h.reshape(M, Dh).astype(cdt),
                              wo[h * Dh:(h + 1) * Dh, :],
                              preferred_element_type=jnp.float32)
    attn = attn + out_b                                                   # (M, E)

    # --- residual + layernorm (dropout = identity in eval) --------------------
    x1 = _layernorm(x_f32 + attn, ln1_g, ln1_b)                           # f32

    # --- MLP: l2(relu(l1(x))) --------------------------------------------------
    h1 = (jnp.dot(x1.astype(cdt), w1_ref[...], preferred_element_type=jnp.float32)
          + b1_ref[...].astype(jnp.float32))
    h1 = jnp.maximum(h1, 0.0)                                             # relu
    mlp = (jnp.dot(h1.astype(cdt), w2_ref[...], preferred_element_type=jnp.float32)
           + b2)

    # --- residual + final layernorm --------------------------------------------
    y = _layernorm(x1 + mlp, ln2_g, ln2_b)
    o_ref[...] = y.reshape(Nb, L, E).astype(o_ref.dtype)


def prepare_params(params, dtype=jnp.float32):
    """One-time host-side transform: transpose every weight into (K, N) layout,
    pack the small per-channel vectors, optionally cast to bf16 for the MXU."""
    vecs = jnp.concatenate(
        [params["out_proj_b"], params["ln1_g"], params["ln1_b"],
         params["b2"], params["ln2_g"], params["ln2_b"]], axis=0)   # (6, E)
    return {
        "wqkv": jnp.asarray(params["in_proj_w"].T, dtype),          # (E, 3E)
        "wo":   jnp.asarray(params["out_proj_w"].T, dtype),         # (E, E)
        "w1t":  jnp.asarray(params["w1"].T, dtype),                 # (E, F)
        "w2t":  jnp.asarray(params["w2"].T, dtype),                 # (F, E)
        "bqkv": jnp.asarray(params["in_proj_b"], dtype),            # (1, 3E)
        "b1":   jnp.asarray(params["b1"], dtype),                   # (1, F)
        "vecs": jnp.asarray(vecs, dtype),                           # (6, E)
    }


def _pick_batch_block(N, L, target_rows=512):
    """Nb batch elements per grid step: aim for Nb*L >= target rows to fill the
    MXU, but keep >= 2 grid steps when possible so v7x's two TCs both work."""
    nb = max(1, min(N, max(1, target_rows // max(L, 1))))
    while N % nb:
        nb -= 1
    if N // nb < 2 and N >= 2:
        nb2 = N // 2
        while nb2 > 1 and N % nb2:
            nb2 -= 1
        nb = max(1, nb2)
    return nb


def transformer_encoder_layer_batch_major(x_nle, prep, nhead, *, batch_block=None):
    """Batch-major entry point: x_nle is (N, L, E).  Weights in `prep` come from
    prepare_params (already transposed / packed / optionally bf16)."""
    N, L, E = x_nle.shape
    F_dim = prep["w1t"].shape[1]
    cdt = prep["wqkv"].dtype
    out_dtype = x_nle.dtype
    x = x_nle.astype(cdt)                 # keep MXU operand dtypes consistent

    nb = batch_block or _pick_batch_block(N, L)
    grid = (N // nb,)

    def const(shape):                     # resident operand, constant block index
        return pl.BlockSpec(shape, lambda b: tuple(0 for _ in shape))

    out = pl.pallas_call(
        functools.partial(encoder_layer_kernel, nhead=nhead),
        out_shape=jax.ShapeDtypeStruct((N, L, E), out_dtype),
        grid=grid,
        in_specs=[
            pl.BlockSpec((nb, L, E), lambda b: (b, 0, 0)),   # x
            const((E, 3 * E)),                               # wqkv
            const((E, E)),                                   # wo
            const((E, F_dim)),                               # w1^T
            const((F_dim, E)),                               # w2^T
            const((1, 3 * E)),                               # qkv bias
            const((1, F_dim)),                               # l1 bias
            const((6, E)),                                   # packed small vectors
        ],
        out_specs=pl.BlockSpec((nb, L, E), lambda b: (b, 0, 0)),
        compiler_params=pltpu.CompilerParams(
            dimension_semantics=("parallel",),
            # Above the 16/32 MiB scoped defaults; <= 64 MiB physical on v7x
            # (raise toward ~96 MiB on v5e/v6e for very large E/F configs).
            vmem_limit_bytes=48 * 1024 * 1024,
        ),
    )(x, prep["wqkv"], prep["wo"], prep["w1t"], prep["w2t"],
      prep["bqkv"], prep["b1"], prep["vecs"])
    return out


def transformer_encoder_layer(x_lne, prep, nhead):
    """PyTorch nn.MultiheadAttention layout (L, N, E).  Prefer the batch-major
    entry point if the surrounding model can supply (N, L, E) directly — the two
    boundary transposes cost two extra HBM passes over the activations."""
    out = transformer_encoder_layer_batch_major(
        jnp.transpose(x_lne, (1, 0, 2)), prep, nhead)
    return jnp.transpose(out, (1, 0, 2))


def reference_forward(x_lne, params, nhead):
    """Plain-JAX reference of the PyTorch module (eval mode)."""
    L, N, E = x_lne.shape
    Dh = E // nhead
    x = x_lne.astype(jnp.float32)
    w = params["in_proj_w"].astype(jnp.float32)
    b = params["in_proj_b"][0].astype(jnp.float32)
    q = jnp.einsum("lne,fe->lnf", x, w[:E]) + b[:E]
    k = jnp.einsum("lne,fe->lnf", x, w[E:2 * E]) + b[E:2 * E]
    v = jnp.einsum("lne,fe->lnf", x, w[2 * E:]) + b[2 * E:]

    def heads(t):  # (L, N, E) -> (N, H, L, Dh)
        return jnp.transpose(t.reshape(L, N, nhead, Dh), (1, 2, 0, 3))

    qh, kh, vh = heads(q) / math.sqrt(Dh), heads(k), heads(v)
    s = jnp.einsum("nhld,nhmd->nhlm", qh, kh)
    p = jax.nn.softmax(s, axis=-1)
    o = jnp.einsum("nhlm,nhmd->nhld", p, vh)
    o = jnp.transpose(o, (2, 0, 1, 3)).reshape(L, N, E)
    attn = jnp.einsum("lne,fe->lnf", o, params["out_proj_w"]) + params["out_proj_b"][0]

    def ln(t, g, bb, eps=1e-5):
        mu = jnp.mean(t, -1, keepdims=True)
        var = jnp.mean((t - mu) ** 2, -1, keepdims=True)
        return (t - mu) / jnp.sqrt(var + eps) * g[0] + bb[0]

    x1 = ln(x + attn, params["ln1_g"], params["ln1_b"])
    h1 = jnp.maximum(jnp.einsum("lne,fe->lnf", x1, params["w1"]) + params["b1"][0], 0.0)
    mlp = jnp.einsum("lnf,ef->lne", h1, params["w2"]) + params["b2"][0]
    return ln(x1 + mlp, params["ln2_g"], params["ln2_b"])


def init_params(key, d_model, nhead, dim_feedforward):
    ks = jax.random.split(key, 8)
    s = 0.02
    return {
        "in_proj_w": s * jax.random.normal(ks[0], (3 * d_model, d_model), jnp.float32),
        "in_proj_b": s * jax.random.normal(ks[1], (1, 3 * d_model), jnp.float32),
        "out_proj_w": s * jax.random.normal(ks[2], (d_model, d_model), jnp.float32),
        "out_proj_b": s * jax.random.normal(ks[3], (1, d_model), jnp.float32),
        "ln1_g": jnp.ones((1, d_model), jnp.float32),
        "ln1_b": jnp.zeros((1, d_model), jnp.float32),
        "w1": s * jax.random.normal(ks[4], (dim_feedforward, d_model), jnp.float32),
        "b1": s * jax.random.normal(ks[5], (1, dim_feedforward), jnp.float32),
        "w2": s * jax.random.normal(ks[6], (d_model, dim_feedforward), jnp.float32),
        "b2": s * jax.random.normal(ks[7], (1, d_model), jnp.float32),
        "ln2_g": jnp.ones((1, d_model), jnp.float32),
        "ln2_b": jnp.zeros((1, d_model), jnp.float32),
    }


if __name__ == "__main__":
    # E and F are multiples of 128 so every intermediate tile / output store is
    # lane-dense (a d_model of 32 would force masked partial stores).
    L, N, d_model, nhead, dim_ff = 8, 4, 128, 4, 256
    key = jax.random.PRNGKey(0)
    kx, kp = jax.random.split(key)
    x = jax.random.normal(kx, (L, N, d_model), jnp.float32)   # (seq, batch, embed)
    params = init_params(kp, d_model, nhead, dim_ff)
    ref = reference_forward(x, params, nhead)

    # f32 operands path.
    prep_f32 = prepare_params(params, jnp.float32)
    out = jax.block_until_ready(transformer_encoder_layer(x, prep_f32, nhead))
    assert out.shape == (L, N, d_model)
    assert jnp.allclose(out, ref, atol=5e-3, rtol=5e-3), float(jnp.max(jnp.abs(out - ref)))

    # bf16 MXU operands / f32 accumulation path (weights stored bf16 in HBM).
    prep_bf16 = prepare_params(params, jnp.bfloat16)
    out_bf16 = jax.block_until_ready(
        transformer_encoder_layer(x.astype(jnp.bfloat16), prep_bf16, nhead))
    bf16_err = float(jnp.max(jnp.abs(out_bf16.astype(jnp.float32) - ref)))
    assert bf16_err < 0.25, bf16_err

    print("KERNEL_OK")
</pallas_src>

<mosaic_0001>
module attributes {stable_mosaic.version = 11 : i64} {
  func.func @encoder_layer_kernel(%arg0: i32, %arg1: memref<2x8x128xf32, #tpu.memory_space<vmem>>, %arg2: memref<128x384xf32, #tpu.memory_space<vmem>>, %arg3: memref<128x128xf32, #tpu.memory_space<vmem>>, %arg4: memref<128x256xf32, #tpu.memory_space<vmem>>, %arg5: memref<256x128xf32, #tpu.memory_space<vmem>>, %arg6: memref<1x384xf32, #tpu.memory_space<vmem>>, %arg7: memref<1x256xf32, #tpu.memory_space<vmem>>, %arg8: memref<6x128xf32, #tpu.memory_space<vmem>>, %arg9: memref<2x8x128xf32, #tpu.memory_space<vmem>>) attributes {dimension_semantics = [#tpu.dimension_semantics<parallel>], iteration_bounds = array<i64: 2>, scalar_prefetch = 0 : i64, scratch_operands = 0 : i64, tpu.core_type = #tpu.core_type<tc>, window_params = [{transform_indices = @transform_0, window_bounds = array<i64: 2, 8, 128>}, {pipeline_mode = #tpu.pipeline_mode<synchronous>, transform_indices = @transform_1, window_bounds = array<i64: 128, 384>}, {pipeline_mode = #tpu.pipeline_mode<synchronous>, transform_indices = @transform_2, window_bounds = array<i64: 128, 128>}, {pipeline_mode = #tpu.pipeline_mode<synchronous>, transform_indices = @transform_3, window_bounds = array<i64: 128, 256>}, {pipeline_mode = #tpu.pipeline_mode<synchronous>, transform_indices = @transform_4, window_bounds = array<i64: 256, 128>}, {pipeline_mode = #tpu.pipeline_mode<synchronous>, transform_indices = @transform_5, window_bounds = array<i64: 1, 384>}, {pipeline_mode = #tpu.pipeline_mode<synchronous>, transform_indices = @transform_6, window_bounds = array<i64: 1, 256>}, {pipeline_mode = #tpu.pipeline_mode<synchronous>, transform_indices = @transform_7, window_bounds = array<i64: 6, 128>}, {transform_indices = @transform_8, window_bounds = array<i64: 2, 8, 128>}]} {
    %c0 = arith.constant 0 : index
    %c0_0 = arith.constant 0 : index
    %c0_1 = arith.constant 0 : index
    %0 = vector.load %arg1[%c0, %c0_0, %c0_1] : memref<2x8x128xf32, #tpu.memory_space<vmem>>, vector<2x8x128xf32>
    %1 = vector.shape_cast %0 : vector<2x8x128xf32> to vector<16x128xf32>
    %c0_2 = arith.constant 0 : index
    %c0_3 = arith.constant 0 : index
    %2 = vector.load %arg8[%c0_2, %c0_3] : memref<6x128xf32, #tpu.memory_space<vmem>>, vector<6x128xf32>
    %3 = vector.extract_strided_slice %2 {offsets = [0, 0], sizes = [1, 128], strides = [1, 1]} : vector<6x128xf32> to vector<1x128xf32>
    %4 = vector.extract_strided_slice %2 {offsets = [1, 0], sizes = [1, 128], strides = [1, 1]} : vector<6x128xf32> to vector<1x128xf32>
    %5 = vector.extract_strided_slice %2 {offsets = [2, 0], sizes = [1, 128], strides = [1, 1]} : vector<6x128xf32> to vector<1x128xf32>
    %6 = vector.extract_strided_slice %2 {offsets = [3, 0], sizes = [1, 128], strides = [1, 1]} : vector<6x128xf32> to vector<1x128xf32>
    %7 = vector.extract_strided_slice %2 {offsets = [4, 0], sizes = [1, 128], strides = [1, 1]} : vector<6x128xf32> to vector<1x128xf32>
    %8 = vector.extract_strided_slice %2 {offsets = [5, 0], sizes = [1, 128], strides = [1, 1]} : vector<6x128xf32> to vector<1x128xf32>
    %c0_4 = arith.constant 0 : index
    %c0_5 = arith.constant 0 : index
    %9 = vector.load %arg2[%c0_4, %c0_5] : memref<128x384xf32, #tpu.memory_space<vmem>>, vector<128x384xf32>
    %cst = arith.constant dense<0.000000e+00> : vector<16x384xf32>
    %10 = tpu.matmul %1, %9, %cst {dimension_numbers = #tpu.dot_dimension_numbers<[1], [0], [0], [1], [0, 0, 1, 1], [], []>} : vector<16x128xf32>, vector<128x384xf32>, vector<16x384xf32> -> vector<16x384xf32>
    %c0_6 = arith.constant 0 : index
    %c0_7 = arith.constant 0 : index
    %11 = vector.load %arg6[%c0_6, %c0_7] : memref<1x384xf32, #tpu.memory_space<vmem>>, vector<1x384xf32>
    %12 = vector.broadcast %11 : vector<1x384xf32> to vector<16x384xf32>
    %13 = arith.addf %10, %12 : vector<16x384xf32>
    %14 = vector.shape_cast %13 : vector<16x384xf32> to vector<2x8x384xf32>
    %c0_8 = arith.constant 0 : index
    %c0_9 = arith.constant 0 : index
    %15 = vector.load %arg3[%c0_8, %c0_9] : memref<128x128xf32, #tpu.memory_space<vmem>>, vector<128x128xf32>
    %cst_10 = arith.constant 0.000000e+00 : f32
    %16 = vector.broadcast %cst_10 : f32 to vector<16x128xf32>
    %17 = vector.extract_strided_slice %14 {offsets = [0, 0, 0], sizes = [2, 8, 32], strides = [1, 1, 1]} : vector<2x8x384xf32> to vector<2x8x32xf32>
    %cst_11 = arith.constant 0.176776692 : f32
    %18 = vector.broadcast %cst_11 : f32 to vector<2x8x32xf32>
    %19 = arith.mulf %17, %18 : vector<2x8x32xf32>
    %20 = vector.extract_strided_slice %14 {offsets = [0, 0, 128], sizes = [2, 8, 32], strides = [1, 1, 1]} : vector<2x8x384xf32> to vector<2x8x32xf32>
    %21 = vector.extract_strided_slice %14 {offsets = [0, 0, 256], sizes = [2, 8, 32], strides = [1, 1, 1]} : vector<2x8x384xf32> to vector<2x8x32xf32>
    "tpu.trace_start"() <{level = 10 : i32, message = "bld,bmd->blm"}> : () -> ()
    %cst_12 = arith.constant dense<0.000000e+00> : vector<2x8x8xf32>
    %22 = tpu.matmul %19, %20, %cst_12 {dimension_numbers = #tpu.dot_dimension_numbers<[2], [2], [1], [1], [0, 0, 0, 1, 1, 1], [0], [0]>} : vector<2x8x32xf32>, vector<2x8x32xf32>, vector<2x8x8xf32> -> vector<2x8x8xf32>
    "tpu.trace_stop"() : () -> ()
    %cst_13 = arith.constant dense<0xFF800000> : vector<2x8xf32>
    %23 = vector.multi_reduction <maximumf>, %22, %cst_13 [2] : vector<2x8x8xf32> to vector<2x8xf32>
    %24 = vector.shape_cast %23 : vector<2x8xf32> to vector<2x8x1xf32>
    %25 = vector.broadcast %24 : vector<2x8x1xf32> to vector<2x8x8xf32>
    %26 = arith.subf %22, %25 : vector<2x8x8xf32>
    %27 = math.exp %26 : vector<2x8x8xf32>
    %cst_14 = arith.constant dense<0.000000e+00> : vector<2x8xf32>
    %28 = vector.multi_reduction <add>, %27, %cst_14 [2] : vector<2x8x8xf32> to vector<2x8xf32>
    %29 = vector.shape_cast %28 : vector<2x8xf32> to vector<2x8x1xf32>
    %30 = tpu.reciprocal %29 {approx = true} : vector<2x8x1xf32> -> vector<2x8x1xf32>
    %31 = vector.broadcast %30 : vector<2x8x1xf32> to vector<2x8x8xf32>
    %32 = arith.mulf %27, %31 : vector<2x8x8xf32>
    "tpu.trace_start"() <{level = 10 : i32, message = "blm,bmd->bld"}> : () -> ()
    %cst_15 = arith.constant dense<0.000000e+00> : vector<2x8x32xf32>
    %33 = tpu.matmul %32, %21, %cst_15 {dimension_numbers = #tpu.dot_dimension_numbers<[2], [1], [1], [2], [0, 0, 0, 1, 1, 2], [0], [0]>} : vector<2x8x8xf32>, vector<2x8x32xf32>, vector<2x8x32xf32> -> vector<2x8x32xf32>
    "tpu.trace_stop"() : () -> ()
    %34 = vector.shape_cast %33 : vector<2x8x32xf32> to vector<16x32xf32>
    %35 = vector.extract_strided_slice %15 {offsets = [0, 0], sizes = [32, 128], strides = [1, 1]} : vector<128x128xf32> to vector<32x128xf32>
    %cst_16 = arith.constant dense<0.000000e+00> : vector<16x128xf32>
    %36 = tpu.matmul %34, %35, %cst_16 {dimension_numbers = #tpu.dot_dimension_numbers<[1], [0], [0], [1], [0, 0, 1, 1], [], []>} : vector<16x32xf32>, vector<32x128xf32>, vector<16x128xf32> -> vector<16x128xf32>
    %37 = arith.addf %16, %36 : vector<16x128xf32>
    %38 = vector.extract_strided_slice %14 {offsets = [0, 0, 32], sizes = [2, 8, 32], strides = [1, 1, 1]} : vector<2x8x384xf32> to vector<2x8x32xf32>
    %cst_17 = arith.constant 0.176776692 : f32
    %39 = vector.broadcast %cst_17 : f32 to vector<2x8x32xf32>
    %40 = arith.mulf %38, %39 : vector<2x8x32xf32>
    %41 = vector.extract_strided_slice %14 {offsets = [0, 0, 160], sizes = [2, 8, 32], strides = [1, 1, 1]} : vector<2x8x384xf32> to vector<2x8x32xf32>
    %42 = vector.extract_strided_slice %14 {offsets = [0, 0, 288], sizes = [2, 8, 32], strides = [1, 1, 1]} : vector<2x8x384xf32> to vector<2x8x32xf32>
    "tpu.trace_start"() <{level = 10 : i32, message = "bld,bmd->blm"}> : () -> ()
    %cst_18 = arith.constant dense<0.000000e+00> : vector<2x8x8xf32>
    %43 = tpu.matmul %40, %41, %cst_18 {dimension_numbers = #tpu.dot_dimension_numbers<[2], [2], [1], [1], [0, 0, 0, 1, 1, 1], [0], [0]>} : vector<2x8x32xf32>, vector<2x8x32xf32>, vector<2x8x8xf32> -> vector<2x8x8xf32>
    "tpu.trace_stop"() : () -> ()
    %cst_19 = arith.constant dense<0xFF800000> : vector<2x8xf32>
    %44 = vector.multi_reduction <maximumf>, %43, %cst_19 [2] : vector<2x8x8xf32> to vector<2x8xf32>
    %45 = vector.shape_cast %44 : vector<2x8xf32> to vector<2x8x1xf32>
    %46 = vector.broadcast %45 : vector<2x8x1xf32> to vector<2x8x8xf32>
    %47 = arith.subf %43, %46 : vector<2x8x8xf32>
    %48 = math.exp %47 : vector<2x8x8xf32>
    %cst_20 = arith.constant dense<0.000000e+00> : vector<2x8xf32>
    %49 = vector.multi_reduction <add>, %48, %cst_20 [2] : vector<2x8x8xf32> to vector<2x8xf32>
    %50 = vector.shape_cast %49 : vector<2x8xf32> to vector<2x8x1xf32>
    %51 = tpu.reciprocal %50 {approx = true} : vector<2x8x1xf32> -> vector<2x8x1xf32>
    %52 = vector.broadcast %51 : vector<2x8x1xf32> to vector<2x8x8xf32>
    %53 = arith.mulf %48, %52 : vector<2x8x8xf32>
    "tpu.trace_start"() <{level = 10 : i32, message = "blm,bmd->bld"}> : () -> ()
    %cst_21 = arith.constant dense<0.000000e+00> : vector<2x8x32xf32>
    %54 = tpu.matmul %53, %42, %cst_21 {dimension_numbers = #tpu.dot_dimension_numbers<[2], [1], [1], [2], [0, 0, 0, 1, 1, 2], [0], [0]>} : vector<2x8x8xf32>, vector<2x8x32xf32>, vector<2x8x32xf32> -> vector<2x8x32xf32>
    "tpu.trace_stop"() : () -> ()
    %55 = vector.shape_cast %54 : vector<2x8x32xf32> to vector<16x32xf32>
    %56 = vector.extract_strided_slice %15 {offsets = [32, 0], sizes = [32, 128], strides = [1, 1]} : vector<128x128xf32> to vector<32x128xf32>
    %cst_22 = arith.constant dense<0.000000e+00> : vector<16x128xf32>
    %57 = tpu.matmul %55, %56, %cst_22 {dimension_numbers = #tpu.dot_dimension_numbers<[1], [0], [0], [1], [0, 0, 1, 1], [], []>} : vector<16x32xf32>, vector<32x128xf32>, vector<16x128xf32> -> vector<16x128xf32>
    %58 = arith.addf %37, %57 : vector<16x128xf32>
    %59 = vector.extract_strided_slice %14 {offsets = [0, 0, 64], sizes = [2, 8, 32], strides = [1, 1, 1]} : vector<2x8x384xf32> to vector<2x8x32xf32>
    %cst_23 = arith.constant 0.176776692 : f32
    %60 = vector.broadcast %cst_23 : f32 to vector<2x8x32xf32>
    %61 = arith.mulf %59, %60 : vector<2x8x32xf32>
    %62 = vector.extract_strided_slice %14 {offsets = [0, 0, 192], sizes = [2, 8, 32], strides = [1, 1, 1]} : vector<2x8x384xf32> to vector<2x8x32xf32>
    %63 = vector.extract_strided_slice %14 {offsets = [0, 0, 320], sizes = [2, 8, 32], strides = [1, 1, 1]} : vector<2x8x384xf32> to vector<2x8x32xf32>
    "tpu.trace_start"() <{level = 10 : i32, message = "bld,bmd->blm"}> : () -> ()
    %cst_24 = arith.constant dense<0.000000e+00> : vector<2x8x8xf32>
    %64 = tpu.matmul %61, %62, %cst_24 {dimension_numbers = #tpu.dot_dimension_numbers<[2], [2], [1], [1], [0, 0, 0, 1, 1, 1], [0], [0]>} : vector<2x8x32xf32>, vector<2x8x32xf32>, vector<2x8x8xf32> -> vector<2x8x8xf32>
    "tpu.trace_stop"() : () -> ()
    %cst_25 = arith.constant dense<0xFF800000> : vector<2x8xf32>
    %65 = vector.multi_reduction <maximumf>, %64, %cst_25 [2] : vector<2x8x8xf32> to vector<2x8xf32>
    %66 = vector.shape_cast %65 : vector<2x8xf32> to vector<2x8x1xf32>
    %67 = vector.broadcast %66 : vector<2x8x1xf32> to vector<2x8x8xf32>
    %68 = arith.subf %64, %67 : vector<2x8x8xf32>
    %69 = math.exp %68 : vector<2x8x8xf32>
    %cst_26 = arith.constant dense<0.000000e+00> : vector<2x8xf32>
    %70 = vector.multi_reduction <add>, %69, %cst_26 [2] : vector<2x8x8xf32> to vector<2x8xf32>
    %71 = vector.shape_cast %70 : vector<2x8xf32> to vector<2x8x1xf32>
    %72 = tpu.reciprocal %71 {approx = true} : vector<2x8x1xf32> -> vector<2x8x1xf32>
    %73 = vector.broadcast %72 : vector<2x8x1xf32> to vector<2x8x8xf32>
    %74 = arith.mulf %69, %73 : vector<2x8x8xf32>
    "tpu.trace_start"() <{level = 10 : i32, message = "blm,bmd->bld"}> : () -> ()
    %cst_27 = arith.constant dense<0.000000e+00> : vector<2x8x32xf32>
    %75 = tpu.matmul %74, %63, %cst_27 {dimension_numbers = #tpu.dot_dimension_numbers<[2], [1], [1], [2], [0, 0, 0, 1, 1, 2], [0], [0]>} : vector<2x8x8xf32>, vector<2x8x32xf32>, vector<2x8x32xf32> -> vector<2x8x32xf32>
    "tpu.trace_stop"() : () -> ()
    %76 = vector.shape_cast %75 : vector<2x8x32xf32> to vector<16x32xf32>
    %77 = vector.extract_strided_slice %15 {offsets = [64, 0], sizes = [32, 128], strides = [1, 1]} : vector<128x128xf32> to vector<32x128xf32>
    %cst_28 = arith.constant dense<0.000000e+00> : vector<16x128xf32>
    %78 = tpu.matmul %76, %77, %cst_28 {dimension_numbers = #tpu.dot_dimension_numbers<[1], [0], [0], [1], [0, 0, 1, 1], [], []>} : vector<16x32xf32>, vector<32x128xf32>, vector<16x128xf32> -> vector<16x128xf32>
    %79 = arith.addf %58, %78 : vector<16x128xf32>
    %80 = vector.extract_strided_slice %14 {offsets = [0, 0, 96], sizes = [2, 8, 32], strides = [1, 1, 1]} : vector<2x8x384xf32> to vector<2x8x32xf32>
    %cst_29 = arith.constant 0.176776692 : f32
    %81 = vector.broadcast %cst_29 : f32 to vector<2x8x32xf32>
    %82 = arith.mulf %80, %81 : vector<2x8x32xf32>
    %83 = vector.extract_strided_slice %14 {offsets = [0, 0, 224], sizes = [2, 8, 32], strides = [1, 1, 1]} : vector<2x8x384xf32> to vector<2x8x32xf32>
    %84 = vector.extract_strided_slice %14 {offsets = [0, 0, 352], sizes = [2, 8, 32], strides = [1, 1, 1]} : vector<2x8x384xf32> to vector<2x8x32xf32>
    "tpu.trace_start"() <{level = 10 : i32, message = "bld,bmd->blm"}> : () -> ()
    %cst_30 = arith.constant dense<0.000000e+00> : vector<2x8x8xf32>
    %85 = tpu.matmul %82, %83, %cst_30 {dimension_numbers = #tpu.dot_dimension_numbers<[2], [2], [1], [1], [0, 0, 0, 1, 1, 1], [0], [0]>} : vector<2x8x32xf32>, vector<2x8x32xf32>, vector<2x8x8xf32> -> vector<2x8x8xf32>
    "tpu.trace_stop"() : () -> ()
    %cst_31 = arith.constant dense<0xFF800000> : vector<2x8xf32>
    %86 = vector.multi_reduction <maximumf>, %85, %cst_31 [2] : vector<2x8x8xf32> to vector<2x8xf32>
    %87 = vector.shape_cast %86 : vector<2x8xf32> to vector<2x8x1xf32>
    %88 = vector.broadcast %87 : vector<2x8x1xf32> to vector<2x8x8xf32>
    %89 = arith.subf %85, %88 : vector<2x8x8xf32>
    %90 = math.exp %89 : vector<2x8x8xf32>
    %cst_32 = arith.constant dense<0.000000e+00> : vector<2x8xf32>
    %91 = vector.multi_reduction <add>, %90, %cst_32 [2] : vector<2x8x8xf32> to vector<2x8xf32>
    %92 = vector.shape_cast %91 : vector<2x8xf32> to vector<2x8x1xf32>
    %93 = tpu.reciprocal %92 {approx = true} : vector<2x8x1xf32> -> vector<2x8x1xf32>
    %94 = vector.broadcast %93 : vector<2x8x1xf32> to vector<2x8x8xf32>
    %95 = arith.mulf %90, %94 : vector<2x8x8xf32>
    "tpu.trace_start"() <{level = 10 : i32, message = "blm,bmd->bld"}> : () -> ()
    %cst_33 = arith.constant dense<0.000000e+00> : vector<2x8x32xf32>
    %96 = tpu.matmul %95, %84, %cst_33 {dimension_numbers = #tpu.dot_dimension_numbers<[2], [1], [1], [2], [0, 0, 0, 1, 1, 2], [0], [0]>} : vector<2x8x8xf32>, vector<2x8x32xf32>, vector<2x8x32xf32> -> vector<2x8x32xf32>
    "tpu.trace_stop"() : () -> ()
    %97 = vector.shape_cast %96 : vector<2x8x32xf32> to vector<16x32xf32>
    %98 = vector.extract_strided_slice %15 {offsets = [96, 0], sizes = [32, 128], strides = [1, 1]} : vector<128x128xf32> to vector<32x128xf32>
    %cst_34 = arith.constant dense<0.000000e+00> : vector<16x128xf32>
    %99 = tpu.matmul %97, %98, %cst_34 {dimension_numbers = #tpu.dot_dimension_numbers<[1], [0], [0], [1], [0, 0, 1, 1], [], []>} : vector<16x32xf32>, vector<32x128xf32>, vector<16x128xf32> -> vector<16x128xf32>
    %100 = arith.addf %79, %99 : vector<16x128xf32>
    %101 = vector.broadcast %3 : vector<1x128xf32> to vector<16x128xf32>
    %102 = arith.addf %100, %101 : vector<16x128xf32>
    %103 = arith.addf %1, %102 : vector<16x128xf32>
    %cst_35 = arith.constant dense<0.000000e+00> : vector<16xf32>
    %104 = vector.multi_reduction <add>, %103, %cst_35 [1] : vector<16x128xf32> to vector<16xf32>
    %105 = vector.shape_cast %104 : vector<16xf32> to vector<16x1xf32>
    %cst_36 = arith.constant 1.280000e+02 : f32
    %106 = vector.broadcast %cst_36 : f32 to vector<16x1xf32>
    %107 = arith.divf %105, %106 : vector<16x1xf32>
    %108 = vector.broadcast %107 : vector<16x1xf32> to vector<16x128xf32>
    %109 = arith.subf %103, %108 : vector<16x128xf32>
    %110 = arith.mulf %109, %109 : vector<16x128xf32>
    %cst_37 = arith.constant dense<0.000000e+00> : vector<16xf32>
    %111 = vector.multi_reduction <add>, %110, %cst_37 [1] : vector<16x128xf32> to vector<16xf32>
    %112 = vector.shape_cast %111 : vector<16xf32> to vector<16x1xf32>
    %cst_38 = arith.constant 1.280000e+02 : f32
    %113 = vector.broadcast %cst_38 : f32 to vector<16x1xf32>
    %114 = arith.divf %112, %113 : vector<16x1xf32>
    %cst_39 = arith.constant 9.99999974E-6 : f32
    %115 = vector.broadcast %cst_39 : f32 to vector<16x1xf32>
    %116 = arith.addf %114, %115 : vector<16x1xf32>
    %117 = math.rsqrt %116 : vector<16x1xf32>
    %118 = vector.broadcast %117 : vector<16x1xf32> to vector<16x128xf32>
    %119 = arith.mulf %109, %118 : vector<16x128xf32>
    %120 = vector.broadcast %4 : vector<1x128xf32> to vector<16x128xf32>
    %121 = arith.mulf %119, %120 : vector<16x128xf32>
    %122 = vector.broadcast %5 : vector<1x128xf32> to vector<16x128xf32>
    %123 = arith.addf %121, %122 : vector<16x128xf32>
    %c0_40 = arith.constant 0 : index
    %c0_41 = arith.constant 0 : index
    %124 = vector.load %arg4[%c0_40, %c0_41] : memref<128x256xf32, #tpu.memory_space<vmem>>, vector<128x256xf32>
    %cst_42 = arith.constant dense<0.000000e+00> : vector<16x256xf32>
    %125 = tpu.matmul %123, %124, %cst_42 {dimension_numbers = #tpu.dot_dimension_numbers<[1], [0], [0], [1], [0, 0, 1, 1], [], []>} : vector<16x128xf32>, vector<128x256xf32>, vector<16x256xf32> -> vector<16x256xf32>
    %c0_43 = arith.constant 0 : index
    %c0_44 = arith.constant 0 : index
    %126 = vector.load %arg7[%c0_43, %c0_44] : memref<1x256xf32, #tpu.memory_space<vmem>>, vector<1x256xf32>
    %127 = vector.broadcast %126 : vector<1x256xf32> to vector<16x256xf32>
    %128 = arith.addf %125, %127 : vector<16x256xf32>
    %cst_45 = arith.constant 0.000000e+00 : f32
    %129 = vector.broadcast %cst_45 : f32 to vector<16x256xf32>
    %130 = arith.maximumf %128, %129 : vector<16x256xf32>
    %c0_46 = arith.constant 0 : index
    %c0_47 = arith.constant 0 : index
    %131 = vector.load %arg5[%c0_46, %c0_47] : memref<256x128xf32, #tpu.memory_space<vmem>>, vector<256x128xf32>
    %cst_48 = arith.constant dense<0.000000e+00> : vector<16x128xf32>
    %132 = tpu.matmul %130, %131, %cst_48 {dimension_numbers = #tpu.dot_dimension_numbers<[1], [0], [0], [1], [0, 0, 1, 1], [], []>} : vector<16x256xf32>, vector<256x128xf32>, vector<16x128xf32> -> vector<16x128xf32>
    %133 = vector.broadcast %6 : vector<1x128xf32> to vector<16x128xf32>
    %134 = arith.addf %132, %133 : vector<16x128xf32>
    %135 = arith.addf %123, %134 : vector<16x128xf32>
    %cst_49 = arith.constant dense<0.000000e+00> : vector<16xf32>
    %136 = vector.multi_reduction <add>, %135, %cst_49 [1] : vector<16x128xf32> to vector<16xf32>
    %137 = vector.shape_cast %136 : vector<16xf32> to vector<16x1xf32>
    %cst_50 = arith.constant 1.280000e+02 : f32
    %138 = vector.broadcast %cst_50 : f32 to vector<16x1xf32>
    %139 = arith.divf %137, %138 : vector<16x1xf32>
    %140 = vector.broadcast %139 : vector<16x1xf32> to vector<16x128xf32>
    %141 = arith.subf %135, %140 : vector<16x128xf32>
    %142 = arith.mulf %141, %141 : vector<16x128xf32>
    %cst_51 = arith.constant dense<0.000000e+00> : vector<16xf32>
    %143 = vector.multi_reduction <add>, %142, %cst_51 [1] : vector<16x128xf32> to vector<16xf32>
    %144 = vector.shape_cast %143 : vector<16xf32> to vector<16x1xf32>
    %cst_52 = arith.constant 1.280000e+02 : f32
    %145 = vector.broadcast %cst_52 : f32 to vector<16x1xf32>
    %146 = arith.divf %144, %145 : vector<16x1xf32>
    %cst_53 = arith.constant 9.99999974E-6 : f32
    %147 = vector.broadcast %cst_53 : f32 to vector<16x1xf32>
    %148 = arith.addf %146, %147 : vector<16x1xf32>
    %149 = math.rsqrt %148 : vector<16x1xf32>
    %150 = vector.broadcast %149 : vector<16x1xf32> to vector<16x128xf32>
    %151 = arith.mulf %141, %150 : vector<16x128xf32>
    %152 = vector.broadcast %7 : vector<1x128xf32> to vector<16x128xf32>
    %153 = arith.mulf %151, %152 : vector<16x128xf32>
    %154 = vector.broadcast %8 : vector<1x128xf32> to vector<16x128xf32>
    %155 = arith.addf %153, %154 : vector<16x128xf32>
    %156 = vector.shape_cast %155 : vector<16x128xf32> to vector<2x8x128xf32>
    %c0_54 = arith.constant 0 : index
    %c0_55 = arith.constant 0 : index
    %c0_56 = arith.constant 0 : index
    %157 = vector.load %arg9[%c0_54, %c0_55, %c0_56] : memref<2x8x128xf32, #tpu.memory_space<vmem>>, vector<2x8x128xf32>
    tpu.vector_store %arg9[%c0_54, %c0_55, %c0_56], %156 {strides = array<i32>} : memref<2x8x128xf32, #tpu.memory_space<vmem>>, vector<2x8x128xf32>,
    return
  }
  func.func @transform_0(%arg0: i32) -> (i32, i32, i32) {
    %c0_i32 = arith.constant 0 : i32
    %c0_i32_0 = arith.constant 0 : i32
    %c0_i32_1 = arith.constant 0 : i32
    return %arg0, %c0_i32, %c0_i32_0 : i32, i32, i32
  }
  func.func @transform_1(%arg0: i32) -> (i32, i32) {
    %c0_i32 = arith.constant 0 : i32
    %c0_i32_0 = arith.constant 0 : i32
    %c0_i32_1 = arith.constant 0 : i32
    return %c0_i32, %c0_i32_0 : i32, i32
  }
  func.func @transform_2(%arg0: i32) -> (i32, i32) {
    %c0_i32 = arith.constant 0 : i32
    %c0_i32_0 = arith.constant 0 : i32
    %c0_i32_1 = arith.constant 0 : i32
    return %c0_i32, %c0_i32_0 : i32, i32
  }
  func.func @transform_3(%arg0: i32) -> (i32, i32) {
    %c0_i32 = arith.constant 0 : i32
    %c0_i32_0 = arith.constant 0 : i32
    %c0_i32_1 = arith.constant 0 : i32
    return %c0_i32, %c0_i32_0 : i32, i32
  }
  func.func @transform_4(%arg0: i32) -> (i32, i32) {
    %c0_i32 = arith.constant 0 : i32
    %c0_i32_0 = arith.constant 0 : i32
    %c0_i32_1 = arith.constant 0 : i32
    return %c0_i32, %c0_i32_0 : i32, i32
  }
  func.func @transform_5(%arg0: i32) -> (i32, i32) {
    %c0_i32 = arith.constant 0 : i32
    %c0_i32_0 = arith.constant 0 : i32
    %c0_i32_1 = arith.constant 0 : i32
    return %c0_i32, %c0_i32_0 : i32, i32
  }
  func.func @transform_6(%arg0: i32) -> (i32, i32) {
    %c0_i32 = arith.constant 0 : i32
    %c0_i32_0 = arith.constant 0 : i32
    %c0_i32_1 = arith.constant 0 : i32
    return %c0_i32, %c0_i32_0 : i32, i32
  }
  func.func @transform_7(%arg0: i32) -> (i32, i32) {
    %c0_i32 = arith.constant 0 : i32
    %c0_i32_0 = arith.constant 0 : i32
    %c0_i32_1 = arith.constant 0 : i32
    return %c0_i32, %c0_i32_0 : i32, i32
  }
  func.func @transform_8(%arg0: i32) -> (i32, i32, i32) {
    %c0_i32 = arith.constant 0 : i32
    %c0_i32_0 = arith.constant 0 : i32
    %c0_i32_1 = arith.constant 0 : i32
    return %arg0, %c0_i32, %c0_i32_0 : i32, i32, i32
  }
}

</mosaic_0001>

<llo_original>
// kernel: tpu_custom_call.1
$region0: #{tpu_custom_call.1}
  #allocation0 [shape = 'u32[]', space=smem, size = 0x4, offset = 0x4, fixed_abs, tag = 'smem constant byte address 0x4 - core index']
  #allocation1 [shape = 'u32[72,128]{1,0:T(1,128)}', space=vmem, size = 0x9000, scoped, tag = 'internal scratch']
  %s0 = inlined_call_operand.hbm [shape: f32[4,8,128], index: 0, kind: input, shape index: {}]
  %s1 = inlined_call_operand.hbm [shape: f32[128,384], index: 1, kind: input, shape index: {}]
  %s2 = inlined_call_operand.hbm [shape: f32[128,128], index: 2, kind: input, shape index: {}]
  %s3 = inlined_call_operand.hbm [shape: f32[128,256], index: 3, kind: input, shape index: {}]
  %s4 = inlined_call_operand.hbm [shape: f32[256,128], index: 4, kind: input, shape index: {}]
  %s5 = inlined_call_operand.vmem [shape: f32[1,384], index: 5, kind: input, shape index: {}]
  %s6 = inlined_call_operand.vmem [shape: f32[1,256], index: 6, kind: input, shape index: {}]
  %s7 = inlined_call_operand.hbm [shape: f32[6,128], index: 7, kind: input, shape index: {}]
  %s8 = inlined_call_operand.hbm [shape: f32[4,8,128], index: 8, kind: output, shape index: {}]
  %s9 = sld [smem:[#allocation0]]
  $region89: #{tpu_custom_call.1} parent=0
    _
  %s11 = ssub.s32 1, %s9
  %s12 = scalar_select 0, %s11, %s9
  $region1: #{tpu_custom_call.1} parent=0
    #allocation2 [shape = 'u8[16384]{0}', space=vmem, size = 0x4000, scoped, tag = 'input window, operand 0']
    #allocation3 [shape = 's32[2]{0}', space=sflag, size = 0x8, scoped, tag = 'scoped memory for tpu_custom_call.1']
    #allocation4 [shape = 's32[2]{0}', space=sflag, size = 0x8, scoped, tag = 'scoped memory for tpu_custom_call.1']
    #allocation5 [shape = 'u8[196608]{0}', space=vmem, size = 0x30000, scoped, tag = 'input window, operand 1, single buffered']
    #allocation6 [shape = 's32[1]{0}', space=sflag, size = 0x4, scoped, tag = 'scoped memory for tpu_custom_call.1']
    #allocation7 [shape = 'u8[65536]{0}', space=vmem, size = 0x10000, scoped, tag = 'input window, operand 2, single buffered']
    #allocation8 [shape = 'u8[131072]{0}', space=vmem, size = 0x20000, scoped, tag = 'input window, operand 3, single buffered']
    #allocation9 [shape = 's32[1]{0}', space=sflag, size = 0x4, scoped, tag = 'scoped memory for tpu_custom_call.1']
    #allocation10 [shape = 'u8[131072]{0}', space=vmem, size = 0x20000, scoped, tag = 'input window, operand 4, single buffered']
    #allocation11 [shape = 'u8[4096]{0}', space=vmem, size = 0x1000, scoped, tag = 'input window, operand 7, single buffered']
    #allocation12 [shape = 's32[1]{0}', space=sflag, size = 0x4, scoped, tag = 'scoped memory for tpu_custom_call.1']
    #allocation13 [shape = 'u8[16384]{0}', space=vmem, size = 0x4000, scoped, tag = 'output window, operand 0']
    %13 = vsyncpa [#allocation3], 0
    %s14 = scalar_lea.sflag [#allocation3], 1
    %15 = vsyncpa %s14, 0
    %16 = vsyncpa [#allocation6], 0
    %17 = vsyncpa [#allocation9], 0
    %18 = vsyncpa [#allocation12], 0
    %19 = vsyncpa [#allocation4], 0
    %s20 = scalar_lea.sflag [#allocation4], 1
    %21 = vsyncpa %s20, 0
    loop: start=0, step=1, limit=4
    $region2: #{tpu_custom_call.1} parent=1 // loop_pre_header
      _
    $region3: #{tpu_custom_call.1} parent=1 // loop_header
      %s23 = sphi 0, %s27
      %p24 = scmp.ge.s32.totalorder %s23, 4
      %s33 = sphi 0, %s35
      %s36 = sphi 0, %s33
      %s37 = sphi 0, %s36
      %s53 = sphi 0, %s37
      %s57 = sphi 0, %s57
      %s59 = sphi 0, %s57
      %s60 = sphi 0, %s59
      %s74 = sphi 0, %s60
      %s78 = sphi 0, %s78
      %s80 = sphi 0, %s78
      %s81 = sphi 0, %s80
      %s95 = sphi 0, %s81
      %s99 = sphi 0, %s99
      %s101 = sphi 0, %s99
      %s102 = sphi 0, %s101
      %s116 = sphi 0, %s102
      %s120 = sphi 0, %s120
      %s122 = sphi 0, %s120
      %s123 = sphi 0, %s122
      %s137 = sphi 0, %s123
      %s141 = sphi 0, %s141
      %s143 = sphi 0, %s141
      %s144 = sphi 0, %s143
      %s158 = sphi 0, %s144
      %s162 = sphi 0, %s162
      %s164 = sphi 0, %s162
      %s165 = sphi 0, %s164
      %s179 = sphi 0, %s165
      %s183 = sphi 0, %s183
      %s185 = sphi 0, %s183
      %s186 = sphi 0, %s185
      %s200 = sphi 0, %s186
      %s206 = sphi 0, %s208
      %s209 = sphi 0, %s206
      %s210 = sphi 0, %s209
      %s226 = sphi 0, %s210
    $region4: #{tpu_custom_call.1} parent=1 // loop_header_branch
      %26 = sbr.rel (%p24) target = $region8
    $region5: #{tpu_custom_call.1} parent=1 // loop_body
      %s28 = ssub.s32 %s23, 1
      %s29 = ssub.s32 %s23, 2
      %s30 = sadd.s32 %s23, 1
      %s31 = ssub.s32 %s23, %s30
      %p32 = scmp.eq.s32.totalorder %s31, 0
      %s34 = sadd.s32 %s33, 1
      %s35 = scalar_select %p32, %s33, %s34
      %p38 = pneg %p32
      %p39 = scmp.eq.s32.totalorder %s23, 1
      %p40 = por %p38, %p39
      %p41 = scmp.ne.s32.totalorder %s33, %s36
      %p42 = scmp.eq.s32.totalorder %s23, 0
      %p43 = por %p41, %p42
      %p44 = scmp.ne.s32.totalorder %s33, %s36
      %p45 = scmp.eq.s32.totalorder %s28, 1
      %p46 = por %p44, %p45
      %p47 = scmp.ne.s32.totalorder %s36, %s37
      %p48 = scmp.eq.s32.totalorder %s28, 0
      %p49 = por %p47, %p48
      %p50 = scmp.ne.s32.totalorder %s36, %s37
      %p51 = scmp.eq.s32.totalorder %s29, 1
      %p52 = por %p50, %p51
      %p54 = scmp.ne.s32.totalorder %s37, %s53
      %p55 = scmp.eq.s32.totalorder %s29, 0
      %p56 = por %p54, %p55
      %s58 = sadd.s32 %s57, 1
      %p61 = scmp.eq.s32.totalorder %s23, 1
      %p62 = scmp.ne.s32.totalorder %s57, %s59
      %p63 = scmp.eq.s32.totalorder %s23, 0
      %p64 = por %p62, %p63
      %p65 = scmp.ne.s32.totalorder %s57, %s59
      %p66 = scmp.eq.s32.totalorder %s28, 1
      %p67 = por %p65, %p66
      %p68 = scmp.ne.s32.totalorder %s59, %s60
      %p69 = scmp.eq.s32.totalorder %s28, 0
      %p70 = por %p68, %p69
      %p71 = scmp.ne.s32.totalorder %s59, %s60
      %p72 = scmp.eq.s32.totalorder %s29, 1
      %p73 = por %p71, %p72
      %p75 = scmp.ne.s32.totalorder %s60, %s74
      %p76 = scmp.eq.s32.totalorder %s29, 0
      %p77 = por %p75, %p76
      %s79 = sadd.s32 %s78, 1
      %p82 = scmp.eq.s32.totalorder %s23, 1
      %p83 = scmp.ne.s32.totalorder %s78, %s80
      %p84 = scmp.eq.s32.totalorder %s23, 0
      %p85 = por %p83, %p84
      %p86 = scmp.ne.s32.totalorder %s78, %s80
      %p87 = scmp.eq.s32.totalorder %s28, 1
      %p88 = por %p86, %p87
      %p89 = scmp.ne.s32.totalorder %s80, %s81
      %p90 = scmp.eq.s32.totalorder %s28, 0
      %p91 = por %p89, %p90
      %p92 = scmp.ne.s32.totalorder %s80, %s81
      %p93 = scmp.eq.s32.totalorder %s29, 1
      %p94 = por %p92, %p93
      %p96 = scmp.ne.s32.totalorder %s81, %s95
      %p97 = scmp.eq.s32.totalorder %s29, 0
      %p98 = por %p96, %p97
      %s100 = sadd.s32 %s99, 1
      %p103 = scmp.eq.s32.totalorder %s23, 1
      %p104 = scmp.ne.s32.totalorder %s99, %s101
      %p105 = scmp.eq.s32.totalorder %s23, 0
      %p106 = por %p104, %p105
      %p107 = scmp.ne.s32.totalorder %s99, %s101
      %p108 = scmp.eq.s32.totalorder %s28, 1
      %p109 = por %p107, %p108
      %p110 = scmp.ne.s32.totalorder %s101, %s102
      %p111 = scmp.eq.s32.totalorder %s28, 0
      %p112 = por %p110, %p111
      %p113 = scmp.ne.s32.totalorder %s101, %s102
      %p114 = scmp.eq.s32.totalorder %s29, 1
      %p115 = por %p113, %p114
      %p117 = scmp.ne.s32.totalorder %s102, %s116
      %p118 = scmp.eq.s32.totalorder %s29, 0
      %p119 = por %p117, %p118
      %s121 = sadd.s32 %s120, 1
      %p124 = scmp.eq.s32.totalorder %s23, 1
      %p125 = scmp.ne.s32.totalorder %s120, %s122
      %p126 = scmp.eq.s32.totalorder %s23, 0
      %p127 = por %p125, %p126
      %p128 = scmp.ne.s32.totalorder %s120, %s122
      %p129 = scmp.eq.s32.totalorder %s28, 1
      %p130 = por %p128, %p129
      %p131 = scmp.ne.s32.totalorder %s122, %s123
      %p132 = scmp.eq.s32.totalorder %s28, 0
      %p133 = por %p131, %p132
      %p134 = scmp.ne.s32.totalorder %s122, %s123
      %p135 = scmp.eq.s32.totalorder %s29, 1
      %p136 = por %p134, %p135
      %p138 = scmp.ne.s32.totalorder %s123, %s137
      %p139 = scmp.eq.s32.totalorder %s29, 0
      %p140 = por %p138, %p139
      %s142 = sadd.s32 %s141, 1
      %p145 = scmp.eq.s32.totalorder %s23, 1
      %p146 = scmp.ne.s32.totalorder %s141, %s143
      %p147 = scmp.eq.s32.totalorder %s23, 0
      %p148 = por %p146, %p147
      %p149 = scmp.ne.s32.totalorder %s141, %s143
      %p150 = scmp.eq.s32.totalorder %s28, 1
      %p151 = por %p149, %p150
      %p152 = scmp.ne.s32.totalorder %s143, %s144
      %p153 = scmp.eq.s32.totalorder %s28, 0
      %p154 = por %p152, %p153
      %p155 = scmp.ne.s32.totalorder %s143, %s144
      %p156 = scmp.eq.s32.totalorder %s29, 1
      %p157 = por %p155, %p156
      %p159 = scmp.ne.s32.totalorder %s144, %s158
      %p160 = scmp.eq.s32.totalorder %s29, 0
      %p161 = por %p159, %p160
      %s163 = sadd.s32 %s162, 1
      %p166 = scmp.eq.s32.totalorder %s23, 1
      %p167 = scmp.ne.s32.totalorder %s162, %s164
      %p168 = scmp.eq.s32.totalorder %s23, 0
      %p169 = por %p167, %p168
      %p170 = scmp.ne.s32.totalorder %s162, %s164
      %p171 = scmp.eq.s32.totalorder %s28, 1
      %p172 = por %p170, %p171
      %p173 = scmp.ne.s32.totalorder %s164, %s165
      %p174 = scmp.eq.s32.totalorder %s28, 0
      %p175 = por %p173, %p174
      %p176 = scmp.ne.s32.totalorder %s164, %s165
      %p177 = scmp.eq.s32.totalorder %s29, 1
      %p178 = por %p176, %p177
      %p180 = scmp.ne.s32.totalorder %s165, %s179
      %p181 = scmp.eq.s32.totalorder %s29, 0
      %p182 = por %p180, %p181
      %s184 = sadd.s32 %s183, 1
      %p187 = scmp.eq.s32.totalorder %s23, 1
      %p188 = scmp.ne.s32.totalorder %s183, %s185
      %p189 = scmp.eq.s32.totalorder %s23, 0
      %p190 = por %p188, %p189
      %p191 = scmp.ne.s32.totalorder %s183, %s185
      %p192 = scmp.eq.s32.totalorder %s28, 1
      %p193 = por %p191, %p192
      %p194 = scmp.ne.s32.totalorder %s185, %s186
      %p195 = scmp.eq.s32.totalorder %s28, 0
      %p196 = por %p194, %p195
      %p197 = scmp.ne.s32.totalorder %s185, %s186
      %p198 = scmp.eq.s32.totalorder %s29, 1
      %p199 = por %p197, %p198
      %p201 = scmp.ne.s32.totalorder %s186, %s200
      %p202 = scmp.eq.s32.totalorder %s29, 0
      %p203 = por %p201, %p202
      %s204 = ssub.s32 %s23, %s30
      %p205 = scmp.eq.s32.totalorder %s204, 0
      %s207 = sadd.s32 %s206, 1
      %s208 = scalar_select %p205, %s206, %s207
      %p211 = pneg %p205
      %p212 = scmp.eq.s32.totalorder %s23, 1
      %p213 = por %p211, %p212
      %p214 = scmp.ne.s32.totalorder %s206, %s209
      %p215 = scmp.eq.s32.totalorder %s23, 0
      %p216 = por %p214, %p215
      %p217 = scmp.ne.s32.totalorder %s206, %s209
      %p218 = scmp.eq.s32.totalorder %s28, 1
      %p219 = por %p217, %p218
      %p220 = scmp.ne.s32.totalorder %s209, %s210
      %p221 = scmp.eq.s32.totalorder %s28, 0
      %p222 = por %p220, %p221
      %p223 = scmp.ne.s32.totalorder %s209, %s210
      %p224 = scmp.eq.s32.totalorder %s29, 1
      %p225 = por %p223, %p224
      %p227 = scmp.ne.s32.totalorder %s210, %s226
      %p228 = scmp.eq.s32.totalorder %s29, 0
      %p229 = por %p227, %p228
      %p230 = scmp.le.s32.totalorder 1, %s23
      %p231 = scmp.lt.s32.totalorder %s23, 3
      %p232 = pnand %p230, %p231
      %p233 = pneg %p232
      // Predicated region
      $region9: #{tpu_custom_call.1} parent=5 // pred_check
        _
      $region10: #{tpu_custom_call.1} parent=5 // pred_check_branch
        %235 = sbr.rel (%p232) target = $region12
      $region11: #{tpu_custom_call.1} parent=5 // pred_region
        %s236 = ssub.s32 %s23, 1
        // Predicated region
        $region13: #{tpu_custom_call.1} parent=11 // pred_check
          %p237 = pneg %p70
        $region14: #{tpu_custom_call.1} parent=11 // pred_check_branch
          %239 = sbr.rel (%p237) target = $region16
        $region15: #{tpu_custom_call.1} parent=11 // pred_region
          %241 = vsyncadd [#allocation6], 0
          %s242 = sshll.u32 %s1, 4
          %s243 = int_to_ptr.hbm [resolvable:$true] %s242
          %s244 = sshll.u32 [#allocation5], 4
          %s245 = int_to_ptr.vmem [resolvable:$true] %s244
          %250 = dma.hbm_to_vmem [thread:$0]  %s243, 6144, %s245, [#allocation6], 384, 384, 24
        $region16: #{tpu_custom_call.1} parent=11 // pred_fallthru
          _
        // Predicated region
        $region17: #{tpu_custom_call.1} parent=11 // pred_check
          %p251 = pneg %p91
        $region18: #{tpu_custom_call.1} parent=11 // pred_check_branch
          %253 = sbr.rel (%p251) target = $region20
        $region19: #{tpu_custom_call.1} parent=11 // pred_region
          %255 = vsyncadd [#allocation6], 0
          %s256 = sshll.u32 %s2, 4
          %s257 = int_to_ptr.hbm [resolvable:$true] %s256
          %s258 = sshll.u32 [#allocation7], 4
          %s259 = int_to_ptr.vmem [resolvable:$true] %s258
          %264 = dma.hbm_to_vmem [thread:$0]  %s257, 2048, %s259, [#allocation6], 128, 128, 8
        $region20: #{tpu_custom_call.1} parent=11 // pred_fallthru
          _
        // Predicated region
        $region21: #{tpu_custom_call.1} parent=11 // pred_check
          %p265 = pneg %p112
        $region22: #{tpu_custom_call.1} parent=11 // pred_check_branch
          %267 = sbr.rel (%p265) target = $region24
        $region23: #{tpu_custom_call.1} parent=11 // pred_region
          %269 = vsyncadd [#allocation9], 0
          %s270 = sshll.u32 %s3, 4
          %s271 = int_to_ptr.hbm [resolvable:$true] %s270
          %s272 = sshll.u32 [#allocation8], 4
          %s273 = int_to_ptr.vmem [resolvable:$true] %s272
          %278 = dma.hbm_to_vmem [thread:$0]  %s271, 4096, %s273, [#allocation9], 256, 256, 16
        $region24: #{tpu_custom_call.1} parent=11 // pred_fallthru
          _
        // Predicated region
        $region25: #{tpu_custom_call.1} parent=11 // pred_check
          %p279 = pneg %p133
        $region26: #{tpu_custom_call.1} parent=11 // pred_check_branch
          %281 = sbr.rel (%p279) target = $region28
        $region27: #{tpu_custom_call.1} parent=11 // pred_region
          %283 = vsyncadd [#allocation9], 0
          %s284 = sshll.u32 %s4, 4
          %s285 = int_to_ptr.hbm [resolvable:$true] %s284
          %s286 = sshll.u32 [#allocation10], 4
          %s287 = int_to_ptr.vmem [resolvable:$true] %s286
          %292 = dma.hbm_to_vmem [thread:$0]  %s285, 4096, %s287, [#allocation9], 128, 128, 8
        $region28: #{tpu_custom_call.1} parent=11 // pred_fallthru
          _
        // Predicated region
        $region29: #{tpu_custom_call.1} parent=11 // pred_check
          %p293 = pneg %p154
        $region30: #{tpu_custom_call.1} parent=11 // pred_check_branch
          %295 = sbr.rel (%p293) target = $region32
        $region31: #{tpu_custom_call.1} parent=11 // pred_region
          _
        $region32: #{tpu_custom_call.1} parent=11 // pred_fallthru
          _
        // Predicated region
        $region33: #{tpu_custom_call.1} parent=11 // pred_check
          %p296 = pneg %p175
        $region34: #{tpu_custom_call.1} parent=11 // pred_check_branch
          %298 = sbr.rel (%p296) target = $region36
        $region35: #{tpu_custom_call.1} parent=11 // pred_region
          _
        $region36: #{tpu_custom_call.1} parent=11 // pred_fallthru
          _
        // Predicated region
        $region37: #{tpu_custom_call.1} parent=11 // pred_check
          %p299 = pneg %p196
        $region38: #{tpu_custom_call.1} parent=11 // pred_check_branch
          %301 = sbr.rel (%p299) target = $region40
        $region39: #{tpu_custom_call.1} parent=11 // pred_region
          %303 = vsyncadd [#allocation12], 0
          %s305 = sshll.u32 %s7, 4
          %s306 = int_to_ptr.hbm [resolvable:$true] %s305
          %s307 = sshll.u32 [#allocation11], 4
          %s308 = int_to_ptr.vmem [resolvable:$true] %s307
          %310 = dma.hbm_to_vmem [thread:$0]  %s306, 128, %s308, [#allocation12]
        $region40: #{tpu_custom_call.1} parent=11 // pred_fallthru
          _
      $region12: #{tpu_custom_call.1} parent=5 // pred_fallthru
        _
      %p311 = scmp.lt.s32.totalorder %s23, 2
      // Predicated region
      $region41: #{tpu_custom_call.1} parent=5 // pred_check
        %p312 = pneg %p311
      $region42: #{tpu_custom_call.1} parent=5 // pred_check_branch
        %314 = sbr.rel (%p312) target = $region44
      $region43: #{tpu_custom_call.1} parent=5 // pred_region
        // Predicated region
        $region45: #{tpu_custom_call.1} parent=43 // pred_check
          %p315 = pneg %p43
        $region46: #{tpu_custom_call.1} parent=43 // pred_check_branch
          %317 = sbr.rel (%p315) target = $region48
        $region47: #{tpu_custom_call.1} parent=43 // pred_region
          %s318 = sand.u32 %s33, 1
          %s319 = scalar_lea.sflag [#allocation3], %s318
          %s320 = sand.u32 %s33, 1
          %s321 = smul.addr %s320, 16
          %s322 = scalar_lea.vmem [#allocation2], %s321
          %s323 = smul.u32 2, %s23
          %325 = vsyncadd %s319, 0
          %s326 = smul.addr %s323, 8
          %s327 = scalar_lea.hbm %s0, %s326
          %s328 = sshll.u32 %s327, 4
          %s329 = int_to_ptr.hbm [resolvable:$true] %s328
          %s330 = sshll.u32 %s322, 4
          %s331 = int_to_ptr.vmem [resolvable:$true] %s330
          %336 = dma.hbm_to_vmem [thread:$0]  %s329, 256, %s331, %s319, 128, 128, 8
        $region48: #{tpu_custom_call.1} parent=43 // pred_fallthru
          _
      $region44: #{tpu_custom_call.1} parent=5 // pred_fallthru
        _
      %p337 = scmp.le.s32.totalorder 1, %s23
      %p338 = scmp.lt.s32.totalorder %s23, 3
      %p339 = pnand %p337, %p338
      %p340 = pneg %p339
      // Predicated region
      $region49: #{tpu_custom_call.1} parent=5 // pred_check
        _
      $region50: #{tpu_custom_call.1} parent=5 // pred_check_branch
        %342 = sbr.rel (%p339) target = $region52
      $region51: #{tpu_custom_call.1} parent=5 // pred_region
        %s343 = ssub.s32 %s23, 1
        %s344 = sand.u32 %s36, 1
        %s345 = scalar_lea.sflag [#allocation3], %s344
        %s346 = sand.u32 %s36, 1
        %s347 = smul.addr %s346, 16
        %s348 = scalar_lea.vmem [#allocation2], %s347
        // Predicated region
        $region53: #{tpu_custom_call.1} parent=51 // pred_check
          %p349 = pneg %p49
        $region54: #{tpu_custom_call.1} parent=51 // pred_check_branch
          %351 = sbr.rel (%p349) target = $region56
        $region55: #{tpu_custom_call.1} parent=51 // pred_region
          %353 = dma.done %s345, 256
        $region56: #{tpu_custom_call.1} parent=51 // pred_fallthru
          _
        // Predicated region
        $region57: #{tpu_custom_call.1} parent=51 // pred_check
          %p354 = pneg %p70
        $region58: #{tpu_custom_call.1} parent=51 // pred_check_branch
          %356 = sbr.rel (%p354) target = $region60
        $region59: #{tpu_custom_call.1} parent=51 // pred_region
          %358 = dma.done [#allocation6], 6144
        $region60: #{tpu_custom_call.1} parent=51 // pred_fallthru
          _
        // Predicated region
        $region61: #{tpu_custom_call.1} parent=51 // pred_check
          %p359 = pneg %p91
        $region62: #{tpu_custom_call.1} parent=51 // pred_check_branch
          %361 = sbr.rel (%p359) target = $region64
        $region63: #{tpu_custom_call.1} parent=51 // pred_region
          %363 = dma.done [#allocation6], 2048
        $region64: #{tpu_custom_call.1} parent=51 // pred_fallthru
          _
        // Predicated region
        $region65: #{tpu_custom_call.1} parent=51 // pred_check
          %p364 = pneg %p112
        $region66: #{tpu_custom_call.1} parent=51 // pred_check_branch
          %366 = sbr.rel (%p364) target = $region68
        $region67: #{tpu_custom_call.1} parent=51 // pred_region
          %368 = dma.done [#allocation9], 4096
        $region68: #{tpu_custom_call.1} parent=51 // pred_fallthru
          _
        // Predicated region
        $region69: #{tpu_custom_call.1} parent=51 // pred_check
          %p369 = pneg %p133
        $region70: #{tpu_custom_call.1} parent=51 // pred_check_branch
          %371 = sbr.rel (%p369) target = $region72
        $region71: #{tpu_custom_call.1} parent=51 // pred_region
          %373 = dma.done [#allocation9], 4096
        $region72: #{tpu_custom_call.1} parent=51 // pred_fallthru
          _
        // Predicated region
        $region73: #{tpu_custom_call.1} parent=51 // pred_check
          %p374 = pneg %p196
        $region74: #{tpu_custom_call.1} parent=51 // pred_check_branch
          %376 = sbr.rel (%p374) target = $region76
        $region75: #{tpu_custom_call.1} parent=51 // pred_region
          %378 = dma.done [#allocation12], 128
        $region76: #{tpu_custom_call.1} parent=51 // pred_fallthru
          _
        %s379 = sand.u32 %s36, 1
        %s380 = scalar_lea.sflag [#allocation3], %s379
        %s381 = sand.u32 %s36, 1
        %s382 = smul.addr %s381, 16
        %s383 = scalar_lea.vmem [#allocation2], %s382
        %p384 = pneg %p49
        %p385 = pneg %p46
        %p386 = pneg %p70
        %p387 = pneg %p67
        %p388 = pneg %p91
        %p389 = pneg %p88
        %p390 = pneg %p112
        %p391 = pneg %p109
        %p392 = pneg %p133
        %p393 = pneg %p130
        %p394 = pneg %p154
        %p395 = pneg %p151
        %p396 = pneg %p175
        %p397 = pneg %p172
        %p398 = pneg %p196
        %p399 = pneg %p193
        %p400 = pneg %p222
        %p401 = pneg %p219
        %s402 = sand.u32 %s209, 1
        %s403 = scalar_lea.sflag [#allocation4], %s402
        %s404 = sand.u32 %s209, 1
        %s405 = smul.addr %s404, 16
        %s406 = scalar_lea.vmem [#allocation13], %s405
        %s407 = smul.u32 2, %s28
        %s408 = smul.u32 2, %s28
        %v409 = vld [vmem:[%s348] sm:$0xff]
        %v410 = vld [vmem:[%s348 + $0x8] sm:$0xff]
        %v411 = vld [vmem:[#allocation11] sm:$0x3f]
        %v412 = vld [vmem:[#allocation5] sm:$0xff]
        %v413 = vld [vmem:[#allocation5 + $0x8] sm:$0xff]
        %v414 = vld [vmem:[#allocation5 + $0x10] sm:$0xff]
        %v415 = vld [vmem:[#allocation5 + $0x18] sm:$0xff]
        %v416 = vld [vmem:[#allocation5 + $0x20] sm:$0xff]
        %v417 = vld [vmem:[#allocation5 + $0x28] sm:$0xff]
        %v418 = vld [vmem:[#allocation5 + $0x30] sm:$0xff]
        %v419 = vld [vmem:[#allocation5 + $0x38] sm:$0xff]
        %v420 = vld [vmem:[#allocation5 + $0x40] sm:$0xff]
        %v421 = vld [vmem:[#allocation5 + $0x48] sm:$0xff]
        %v422 = vld [vmem:[#allocation5 + $0x50] sm:$0xff]
        %v423 = vld [vmem:[#allocation5 + $0x58] sm:$0xff]
        %v424 = vld [vmem:[#allocation5 + $0x60] sm:$0xff]
        %v425 = vld [vmem:[#allocation5 + $0x68] sm:$0xff]
        %v426 = vld [vmem:[#allocation5 + $0x70] sm:$0xff]
        %v427 = vld [vmem:[#allocation5 + $0x78] sm:$0xff]
        %v428 = vld [vmem:[#allocation5 + $0x80] sm:$0xff]
        %v429 = vld [vmem:[#allocation5 + $0x88] sm:$0xff]
        %v430 = vld [vmem:[#allocation5 + $0x90] sm:$0xff]
        %v431 = vld [vmem:[#allocation5 + $0x98] sm:$0xff]
        %v432 = vld [vmem:[#allocation5 + $0xa0] sm:$0xff]
        %v433 = vld [vmem:[#allocation5 + $0xa8] sm:$0xff]
        %v434 = vld [vmem:[#allocation5 + $0xb0] sm:$0xff]
        %v435 = vld [vmem:[#allocation5 + $0xb8] sm:$0xff]
        %v436 = vld [vmem:[#allocation5 + $0xc0] sm:$0xff]
        %v437 = vld [vmem:[#allocation5 + $0xc8] sm:$0xff]
        %v438 = vld [vmem:[#allocation5 + $0xd0] sm:$0xff]
        %v439 = vld [vmem:[#allocation5 + $0xd8] sm:$0xff]
        %v440 = vld [vmem:[#allocation5 + $0xe0] sm:$0xff]
        %v441 = vld [vmem:[#allocation5 + $0xe8] sm:$0xff]
        %v442 = vld [vmem:[#allocation5 + $0xf0] sm:$0xff]
        %v443 = vld [vmem:[#allocation5 + $0xf8] sm:$0xff]
        %v444 = vld [vmem:[#allocation5 + $0x100] sm:$0xff]
        %v445 = vld [vmem:[#allocation5 + $0x108] sm:$0xff]
        %v446 = vld [vmem:[#allocation5 + $0x110] sm:$0xff]
        %v447 = vld [vmem:[#allocation5 + $0x118] sm:$0xff]
        %v448 = vld [vmem:[#allocation5 + $0x120] sm:$0xff]
        %v449 = vld [vmem:[#allocation5 + $0x128] sm:$0xff]
        %v450 = vld [vmem:[#allocation5 + $0x130] sm:$0xff]
        %v451 = vld [vmem:[#allocation5 + $0x138] sm:$0xff]
        %v452 = vld [vmem:[#allocation5 + $0x140] sm:$0xff]
        %v453 = vld [vmem:[#allocation5 + $0x148] sm:$0xff]
        %v454 = vld [vmem:[#allocation5 + $0x150] sm:$0xff]
        %v455 = vld [vmem:[#allocation5 + $0x158] sm:$0xff]
        %v456 = vld [vmem:[#allocation5 + $0x160] sm:$0xff]
        %v457 = vld [vmem:[#allocation5 + $0x168] sm:$0xff]
        %v458 = vld [vmem:[#allocation5 + $0x170] sm:$0xff]
        %v459 = vld [vmem:[#allocation5 + $0x178] sm:$0xff]
        %v460 = vld [vmem:[%s5] sm:$0x7]
        %v462 = vperm.slane %v460, 0
        %v463 = vperm.slane %v460, 1
        %v464 = vperm.slane %v460, 2
        %468 = vmatpush.msra.mxu0 %v457
        %469 = vmatpush.msra.mxu0 %v454
        %470 = vmatpush.msra.mxu0 %v451
        %471 = vmatpush.msra.mxu0 %v448
        %472 = vmatpush.msra.mxu0 %v445
        %473 = vmatpush.msra.mxu0 %v442
        %474 = vmatpush.msra.mxu0 %v439
        %475 = vmatpush.msra.mxu0 %v436
        %476 = vmatpush.msra.mxu0 %v433
        %477 = vmatpush.msra.mxu0 %v430
        %478 = vmatpush.msra.mxu0 %v427
        %479 = vmatpush.msra.mxu0 %v424
        %480 = vmatpush.msra.mxu0 %v421
        %481 = vmatpush.msra.mxu0 %v418
        %482 = vmatpush.msra.mxu0 %v415
        %483 = vmatpush.msra.mxu0 %v412
        %484 = vmatmul.f32.gmra.mxu0 %v409
        %v485 = vpop.f32.mrf.mxu0
        %v486 = vadd.f32 %v462, %v485
        %487 = vmatmul.f32.gmra.mxu0 %v410
        %v488 = vpop.f32.mrf.mxu0
        %v489 = vadd.f32 %v462, %v488
        %490 = vdwg.mxu0
        %491 = vmatpush.msra.mxu0 %v458
        %492 = vmatpush.msra.mxu0 %v455
        %493 = vmatpush.msra.mxu0 %v452
        %494 = vmatpush.msra.mxu0 %v449
        %495 = vmatpush.msra.mxu0 %v446
        %496 = vmatpush.msra.mxu0 %v443
        %497 = vmatpush.msra.mxu0 %v440
        %498 = vmatpush.msra.mxu0 %v437
        %499 = vmatpush.msra.mxu0 %v434
        %500 = vmatpush.msra.mxu0 %v431
        %501 = vmatpush.msra.mxu0 %v428
        %502 = vmatpush.msra.mxu0 %v425
        %503 = vmatpush.msra.mxu0 %v422
        %504 = vmatpush.msra.mxu0 %v419
        %505 = vmatpush.msra.mxu0 %v416
        %506 = vmatpush.msra.mxu0 %v413
        %507 = vmatmul.f32.gmra.mxu0 %v409
        %v508 = vpop.f32.mrf.mxu0
        %v509 = vadd.f32 %v463, %v508
        %510 = vmatmul.f32.gmra.mxu0 %v410
        %v511 = vpop.f32.mrf.mxu0
        %v512 = vadd.f32 %v463, %v511
        %513 = vdwg.mxu0
        %514 = vmatpush.msra.mxu0 %v459
        %515 = vmatpush.msra.mxu0 %v456
        %516 = vmatpush.msra.mxu0 %v453
        %517 = vmatpush.msra.mxu0 %v450
        %518 = vmatpush.msra.mxu0 %v447
        %519 = vmatpush.msra.mxu0 %v444
        %520 = vmatpush.msra.mxu0 %v441
        %521 = vmatpush.msra.mxu0 %v438
        %522 = vmatpush.msra.mxu0 %v435
        %523 = vmatpush.msra.mxu0 %v432
        %524 = vmatpush.msra.mxu0 %v429
        %525 = vmatpush.msra.mxu0 %v426
        %526 = vmatpush.msra.mxu0 %v423
        %527 = vmatpush.msra.mxu0 %v420
        %528 = vmatpush.msra.mxu0 %v417
        %529 = vmatpush.msra.mxu0 %v414
        %530 = vmatmul.f32.gmra.mxu0 %v409
        %v531 = vpop.f32.mrf.mxu0
        %v532 = vadd.f32 %v464, %v531
        %533 = vmatmul.f32.gmra.mxu0 %v410
        %v534 = vpop.f32.mrf.mxu0
        %v535 = vadd.f32 %v464, %v534
        %536 = vdwg.mxu0
        %v537 = vld [vmem:[#allocation7] sm:$0xff]
        %v538 = vld [vmem:[#allocation7 + $0x8] sm:$0xff]
        %v539 = vld [vmem:[#allocation7 + $0x10] sm:$0xff]
        %v540 = vld [vmem:[#allocation7 + $0x18] sm:$0xff]
        %v541 = vld [vmem:[#allocation7 + $0x20] sm:$0xff]
        %v542 = vld [vmem:[#allocation7 + $0x28] sm:$0xff]
        %v543 = vld [vmem:[#allocation7 + $0x30] sm:$0xff]
        %v544 = vld [vmem:[#allocation7 + $0x38] sm:$0xff]
        %v545 = vld [vmem:[#allocation7 + $0x40] sm:$0xff]
        %v546 = vld [vmem:[#allocation7 + $0x48] sm:$0xff]
        %v547 = vld [vmem:[#allocation7 + $0x50] sm:$0xff]
        %v548 = vld [vmem:[#allocation7 + $0x58] sm:$0xff]
        %v549 = vld [vmem:[#allocation7 + $0x60] sm:$0xff]
        %v550 = vld [vmem:[#allocation7 + $0x68] sm:$0xff]
        %v551 = vld [vmem:[#allocation7 + $0x70] sm:$0xff]
        %v552 = vld [vmem:[#allocation7 + $0x78] sm:$0xff]
        %v553 = vmul.f32 %v486, 0.17677669
        %v554 = vmul.f32 %v489, 0.17677669
        %vm555 = vcmask 261120
        %v557 = vsel %vm555, %v553, 0
        %v560 = vsel %vm555, %v509, 0
        %562 = vmatpush.xpose.msra.mxu0 0.0
        %563 = vmatpush.xpose.msra.mxu0 0.0
        %564 = vmatpush.xpose.msra.mxu0 0.0
        %565 = vmatpush.xpose.msra.mxu0 0.0
        %566 = vmatpush.xpose.msra.mxu0 0.0
        %567 = vmatpush.xpose.msra.mxu0 0.0
        %568 = vmatpush.xpose.msra.mxu0 0.0
        %569 = vmatpush.xpose.msra.mxu0 0.0
        %570 = vmatpush.xpose.msra.mxu0 0.0
        %571 = vmatpush.xpose.msra.mxu0 0.0
        %572 = vmatpush.xpose.msra.mxu0 0.0
        %573 = vmatpush.xpose.msra.mxu0 0.0
        %574 = vmatpush.xpose.msra.mxu0 0.0
        %575 = vmatpush.xpose.msra.mxu0 0.0
        %576 = vmatpush.xpose.msra.mxu0 0.0
        %577 = vmatpush.xpose.msra.mxu0 %v560
        %578 = vmatmul.f32.gmra.mxu0 %v557
        %v579 = vpop.f32.mrf.mxu0
        %v580 = vadd.f32 0.0, %v579
        %581 = vdwg.mxu0
        %v583 = vsel %vm555, %v554, 0
        %v586 = vsel %vm555, %v512, 0
        %588 = vmatpush.xpose.msra.mxu0 0.0
        %589 = vmatpush.xpose.msra.mxu0 0.0
        %590 = vmatpush.xpose.msra.mxu0 0.0
        %591 = vmatpush.xpose.msra.mxu0 0.0
        %592 = vmatpush.xpose.msra.mxu0 0.0
        %593 = vmatpush.xpose.msra.mxu0 0.0
        %594 = vmatpush.xpose.msra.mxu0 0.0
        %595 = vmatpush.xpose.msra.mxu0 0.0
        %596 = vmatpush.xpose.msra.mxu0 0.0
        %597 = vmatpush.xpose.msra.mxu0 0.0
        %598 = vmatpush.xpose.msra.mxu0 0.0
        %599 = vmatpush.xpose.msra.mxu0 0.0
        %600 = vmatpush.xpose.msra.mxu0 0.0
        %601 = vmatpush.xpose.msra.mxu0 0.0
        %602 = vmatpush.xpose.msra.mxu0 0.0
        %603 = vmatpush.xpose.msra.mxu0 %v586
        %604 = vmatmul.f32.gmra.mxu0 %v583
        %v605 = vpop.f32.mrf.mxu0
        %v606 = vadd.f32 0.0, %v605
        %607 = vdwg.mxu0
        %vm608 = vcmask 64512
        %v609 = vsel %vm608, %v580, -inf
        %610 = vmax.xlane.f32.xlu0 %v609
        %v611 = vpop.xlane.xlu0 %610
        %v612 = vsel %vm608, %v606, -inf
        %613 = vmax.xlane.f32.xlu0 %v612
        %v614 = vpop.xlane.xlu0 %613
        %v615 = vsub.f32 %v580, %v611
        %v616 = vsub.f32 %v606, %v614
        %v617 = vmul.f32 %v615, 1.442695
        %v618 = vpow.pop %v617
        %v619 = vmul.f32 %v616, 1.442695
        %v620 = vpow.pop %v619
        %v621 = vsel %vm608, %v618, 0.0
        %622 = vadd.xlane.f32.xlu0 %v621
        %v623 = vpop.xlane.xlu0 %622
        %v624 = vsel %vm608, %v620, 0.0
        %625 = vadd.xlane.f32.xlu0 %v624
        %v626 = vpop.xlane.xlu0 %625
        %v627 = vrcp.pop %v623
        %v628 = vrcp.pop %v626
        %v629 = vmul.f32 %v618, %v627
        %v630 = vmul.f32 %v620, %v628
        %v632 = vsel %vm608, %v629, 0
        %634 = vmatpush.msra.mxu0 0.0
        %635 = vmatpush.msra.mxu0 0.0
        %636 = vmatpush.msra.mxu0 0.0
        %637 = vmatpush.msra.mxu0 0.0
        %638 = vmatpush.msra.mxu0 0.0
        %639 = vmatpush.msra.mxu0 0.0
        %640 = vmatpush.msra.mxu0 0.0
        %641 = vmatpush.msra.mxu0 0.0
        %642 = vmatpush.msra.mxu0 0.0
        %643 = vmatpush.msra.mxu0 0.0
        %644 = vmatpush.msra.mxu0 0.0
        %645 = vmatpush.msra.mxu0 0.0
        %646 = vmatpush.msra.mxu0 0.0
        %647 = vmatpush.msra.mxu0 0.0
        %648 = vmatpush.msra.mxu0 0.0
        %649 = vmatpush.msra.mxu0 %v532
        %650 = vmatmul.f32.gmra.mxu0 %v632
        %v651 = vpop.f32.mrf.mxu0
        %v652 = vadd.f32 0.0, %v651
        %653 = vdwg.mxu0
        %v655 = vsel %vm608, %v630, 0
        %657 = vmatpush.msra.mxu0 0.0
        %658 = vmatpush.msra.mxu0 0.0
        %659 = vmatpush.msra.mxu0 0.0
        %660 = vmatpush.msra.mxu0 0.0
        %661 = vmatpush.msra.mxu0 0.0
        %662 = vmatpush.msra.mxu0 0.0
        %663 = vmatpush.msra.mxu0 0.0
        %664 = vmatpush.msra.mxu0 0.0
        %665 = vmatpush.msra.mxu0 0.0
        %666 = vmatpush.msra.mxu0 0.0
        %667 = vmatpush.msra.mxu0 0.0
        %668 = vmatpush.msra.mxu0 0.0
        %669 = vmatpush.msra.mxu0 0.0
        %670 = vmatpush.msra.mxu0 0.0
        %671 = vmatpush.msra.mxu0 0.0
        %672 = vmatpush.msra.mxu0 %v535
        %673 = vmatmul.f32.gmra.mxu0 %v655
        %v674 = vpop.f32.mrf.mxu0
        %v675 = vadd.f32 0.0, %v674
        %676 = vdwg.mxu0
        %677 = vrot.lane.b32.xlu0 %v553, 96
        %v678 = vpop.permute.xlu0 %677
        %679 = vrot.lane.b32.xlu0 %v509, 96
        %v680 = vpop.permute.xlu0 %679
        %v681 = vsel %vm555, %v678, 0
        %v683 = vsel %vm555, %v680, 0
        %685 = vmatpush.xpose.msra.mxu0 0.0
        %686 = vmatpush.xpose.msra.mxu0 0.0
        %687 = vmatpush.xpose.msra.mxu0 0.0
        %688 = vmatpush.xpose.msra.mxu0 0.0
        %689 = vmatpush.xpose.msra.mxu0 0.0
        %690 = vmatpush.xpose.msra.mxu0 0.0
        %691 = vmatpush.xpose.msra.mxu0 0.0
        %692 = vmatpush.xpose.msra.mxu0 0.0
        %693 = vmatpush.xpose.msra.mxu0 0.0
        %694 = vmatpush.xpose.msra.mxu0 0.0
        %695 = vmatpush.xpose.msra.mxu0 0.0
        %696 = vmatpush.xpose.msra.mxu0 0.0
        %697 = vmatpush.xpose.msra.mxu0 0.0
        %698 = vmatpush.xpose.msra.mxu0 0.0
        %699 = vmatpush.xpose.msra.mxu0 0.0
        %700 = vmatpush.xpose.msra.mxu0 %v683
        %701 = vmatmul.f32.gmra.mxu0 %v681
        %v702 = vpop.f32.mrf.mxu0
        %v703 = vadd.f32 0.0, %v702
        %704 = vdwg.mxu0
        %705 = vrot.lane.b32.xlu0 %v554, 96
        %v706 = vpop.permute.xlu0 %705
        %707 = vrot.lane.b32.xlu0 %v512, 96
        %v708 = vpop.permute.xlu0 %707
        %v709 = vsel %vm555, %v706, 0
        %v711 = vsel %vm555, %v708, 0
        %713 = vmatpush.xpose.msra.mxu0 0.0
        %714 = vmatpush.xpose.msra.mxu0 0.0
        %715 = vmatpush.xpose.msra.mxu0 0.0
        %716 = vmatpush.xpose.msra.mxu0 0.0
        %717 = vmatpush.xpose.msra.mxu0 0.0
        %718 = vmatpush.xpose.msra.mxu0 0.0
        %719 = vmatpush.xpose.msra.mxu0 0.0
        %720 = vmatpush.xpose.msra.mxu0 0.0
        %721 = vmatpush.xpose.msra.mxu0 0.0
        %722 = vmatpush.xpose.msra.mxu0 0.0
        %723 = vmatpush.xpose.msra.mxu0 0.0
        %724 = vmatpush.xpose.msra.mxu0 0.0
        %725 = vmatpush.xpose.msra.mxu0 0.0
        %726 = vmatpush.xpose.msra.mxu0 0.0
        %727 = vmatpush.xpose.msra.mxu0 0.0
        %728 = vmatpush.xpose.msra.mxu0 %v711
        %729 = vmatmul.f32.gmra.mxu0 %v709
        %v730 = vpop.f32.mrf.mxu0
        %v731 = vadd.f32 0.0, %v730
        %732 = vdwg.mxu0
        %v733 = vsel %vm608, %v703, -inf
        %734 = vmax.xlane.f32.xlu0 %v733
        %v735 = vpop.xlane.xlu0 %734
        %v736 = vsel %vm608, %v731, -inf
        %737 = vmax.xlane.f32.xlu0 %v736
        %v738 = vpop.xlane.xlu0 %737
        %v739 = vsub.f32 %v703, %v735
        %v740 = vsub.f32 %v731, %v738
        %v741 = vmul.f32 %v739, 1.442695
        %v742 = vpow.pop %v741
        %v743 = vmul.f32 %v740, 1.442695
        %v744 = vpow.pop %v743
        %v745 = vsel %vm608, %v742, 0.0
        %746 = vadd.xlane.f32.xlu0 %v745
        %v747 = vpop.xlane.xlu0 %746
        %v748 = vsel %vm608, %v744, 0.0
        %749 = vadd.xlane.f32.xlu0 %v748
        %v750 = vpop.xlane.xlu0 %749
        %v751 = vrcp.pop %v747
        %v752 = vrcp.pop %v750
        %v753 = vmul.f32 %v742, %v751
        %v754 = vmul.f32 %v744, %v752
        %756 = vrot.lane.b32.xlu0 %v532, 96
        %v757 = vpop.permute.xlu0 %756
        %v760 = vsel %vm608, %v753, 0
        %762 = vmatpush.msra.mxu0 0.0
        %763 = vmatpush.msra.mxu0 0.0
        %764 = vmatpush.msra.mxu0 0.0
        %765 = vmatpush.msra.mxu0 0.0
        %766 = vmatpush.msra.mxu0 0.0
        %767 = vmatpush.msra.mxu0 0.0
        %768 = vmatpush.msra.mxu0 0.0
        %769 = vmatpush.msra.mxu0 0.0
        %770 = vmatpush.msra.mxu0 0.0
        %771 = vmatpush.msra.mxu0 0.0
        %772 = vmatpush.msra.mxu0 0.0
        %773 = vmatpush.msra.mxu0 0.0
        %774 = vmatpush.msra.mxu0 0.0
        %775 = vmatpush.msra.mxu0 0.0
        %776 = vmatpush.msra.mxu0 0.0
        %777 = vmatpush.msra.mxu0 %v757
        %778 = vmatmul.f32.gmra.mxu0 %v760
        %v779 = vpop.f32.mrf.mxu0
        %v780 = vadd.f32 0.0, %v779
        %781 = vdwg.mxu0
        %783 = vrot.lane.b32.xlu0 %v535, 96
        %v784 = vpop.permute.xlu0 %783
        %v787 = vsel %vm608, %v754, 0
        %789 = vmatpush.msra.mxu0 0.0
        %790 = vmatpush.msra.mxu0 0.0
        %791 = vmatpush.msra.mxu0 0.0
        %792 = vmatpush.msra.mxu0 0.0
        %793 = vmatpush.msra.mxu0 0.0
        %794 = vmatpush.msra.mxu0 0.0
        %795 = vmatpush.msra.mxu0 0.0
        %796 = vmatpush.msra.mxu0 0.0
        %797 = vmatpush.msra.mxu0 0.0
        %798 = vmatpush.msra.mxu0 0.0
        %799 = vmatpush.msra.mxu0 0.0
        %800 = vmatpush.msra.mxu0 0.0
        %801 = vmatpush.msra.mxu0 0.0
        %802 = vmatpush.msra.mxu0 0.0
        %803 = vmatpush.msra.mxu0 0.0
        %804 = vmatpush.msra.mxu0 %v784
        %805 = vmatmul.f32.gmra.mxu0 %v787
        %v806 = vpop.f32.mrf.mxu0
        %v807 = vadd.f32 0.0, %v806
        %808 = vdwg.mxu0
        %v810 = vsel %vm555, %v780, 0
        %v813 = vsel %vm555, %v807, 0
        %815 = vmatpush.msra.mxu0 0.0
        %816 = vmatpush.msra.mxu0 0.0
        %817 = vmatpush.msra.mxu0 0.0
        %818 = vmatpush.msra.mxu0 0.0
        %819 = vmatpush.msra.mxu0 0.0
        %820 = vmatpush.msra.mxu0 0.0
        %821 = vmatpush.msra.mxu0 0.0
        %822 = vmatpush.msra.mxu0 0.0
        %823 = vmatpush.msra.mxu0 0.0
        %824 = vmatpush.msra.mxu0 0.0
        %825 = vmatpush.msra.mxu0 0.0
        %826 = vmatpush.msra.mxu0 0.0
        %827 = vmatpush.msra.mxu0 %v544
        %828 = vmatpush.msra.mxu0 %v543
        %829 = vmatpush.msra.mxu0 %v542
        %830 = vmatpush.msra.mxu0 %v541
        %831 = vmatmul.f32.gmra.mxu0 %v810
        %v832 = vpop.f32.mrf.mxu0
        %v833 = vadd.f32 0.0, %v832
        %834 = vmatmul.f32.gmra.mxu0 %v813
        %v835 = vpop.f32.mrf.mxu0
        %v836 = vadd.f32 0.0, %v835
        %837 = vdwg.mxu0
        %v839 = vsel %vm555, %v652, 0
        %v842 = vsel %vm555, %v675, 0
        %844 = vmatpush.msra.mxu0 0.0
        %845 = vmatpush.msra.mxu0 0.0
        %846 = vmatpush.msra.mxu0 0.0
        %847 = vmatpush.msra.mxu0 0.0
        %848 = vmatpush.msra.mxu0 0.0
        %849 = vmatpush.msra.mxu0 0.0
        %850 = vmatpush.msra.mxu0 0.0
        %851 = vmatpush.msra.mxu0 0.0
        %852 = vmatpush.msra.mxu0 0.0
        %853 = vmatpush.msra.mxu0 0.0
        %854 = vmatpush.msra.mxu0 0.0
        %855 = vmatpush.msra.mxu0 0.0
        %856 = vmatpush.msra.mxu0 %v540
        %857 = vmatpush.msra.mxu0 %v539
        %858 = vmatpush.msra.mxu0 %v538
        %859 = vmatpush.msra.mxu0 %v537
        %860 = vmatmul.f32.gmra.mxu0 %v839
        %v861 = vpop.f32.mrf.mxu0
        %v862 = vadd.f32 %v833, %v861
        %863 = vmatmul.f32.gmra.mxu0 %v842
        %v864 = vpop.f32.mrf.mxu0
        %v865 = vadd.f32 %v836, %v864
        %866 = vdwg.mxu0
        %867 = vrot.lane.b32.xlu0 %v553, 64
        %v868 = vpop.permute.xlu0 %867
        %869 = vrot.lane.b32.xlu0 %v509, 64
        %v870 = vpop.permute.xlu0 %869
        %v871 = vsel %vm555, %v868, 0
        %v873 = vsel %vm555, %v870, 0
        %875 = vmatpush.xpose.msra.mxu0 0.0
        %876 = vmatpush.xpose.msra.mxu0 0.0
        %877 = vmatpush.xpose.msra.mxu0 0.0
        %878 = vmatpush.xpose.msra.mxu0 0.0
        %879 = vmatpush.xpose.msra.mxu0 0.0
        %880 = vmatpush.xpose.msra.mxu0 0.0
        %881 = vmatpush.xpose.msra.mxu0 0.0
        %882 = vmatpush.xpose.msra.mxu0 0.0
        %883 = vmatpush.xpose.msra.mxu0 0.0
        %884 = vmatpush.xpose.msra.mxu0 0.0
        %885 = vmatpush.xpose.msra.mxu0 0.0
        %886 = vmatpush.xpose.msra.mxu0 0.0
        %887 = vmatpush.xpose.msra.mxu0 0.0
        %888 = vmatpush.xpose.msra.mxu0 0.0
        %889 = vmatpush.xpose.msra.mxu0 0.0
        %890 = vmatpush.xpose.msra.mxu0 %v873
        %891 = vmatmul.f32.gmra.mxu0 %v871
        %v892 = vpop.f32.mrf.mxu0
        %v893 = vadd.f32 0.0, %v892
        %894 = vdwg.mxu0
        %895 = vrot.lane.b32.xlu0 %v554, 64
        %v896 = vpop.permute.xlu0 %895
        %897 = vrot.lane.b32.xlu0 %v512, 64
        %v898 = vpop.permute.xlu0 %897
        %v899 = vsel %vm555, %v896, 0
        %v901 = vsel %vm555, %v898, 0
        %903 = vmatpush.xpose.msra.mxu0 0.0
        %904 = vmatpush.xpose.msra.mxu0 0.0
        %905 = vmatpush.xpose.msra.mxu0 0.0
        %906 = vmatpush.xpose.msra.mxu0 0.0
        %907 = vmatpush.xpose.msra.mxu0 0.0
        %908 = vmatpush.xpose.msra.mxu0 0.0
        %909 = vmatpush.xpose.msra.mxu0 0.0
        %910 = vmatpush.xpose.msra.mxu0 0.0
        %911 = vmatpush.xpose.msra.mxu0 0.0
        %912 = vmatpush.xpose.msra.mxu0 0.0
        %913 = vmatpush.xpose.msra.mxu0 0.0
        %914 = vmatpush.xpose.msra.mxu0 0.0
        %915 = vmatpush.xpose.msra.mxu0 0.0
        %916 = vmatpush.xpose.msra.mxu0 0.0
        %917 = vmatpush.xpose.msra.mxu0 0.0
        %918 = vmatpush.xpose.msra.mxu0 %v901
        %919 = vmatmul.f32.gmra.mxu0 %v899
        %v920 = vpop.f32.mrf.mxu0
        %v921 = vadd.f32 0.0, %v920
        %922 = vdwg.mxu0
        %v923 = vsel %vm608, %v893, -inf
        %924 = vmax.xlane.f32.xlu0 %v923
        %v925 = vpop.xlane.xlu0 %924
        %v926 = vsel %vm608, %v921, -inf
        %927 = vmax.xlane.f32.xlu0 %v926
        %v928 = vpop.xlane.xlu0 %927
        %v929 = vsub.f32 %v893, %v925
        %v930 = vsub.f32 %v921, %v928
        %v931 = vmul.f32 %v929, 1.442695
        %v932 = vpow.pop %v931
        %v933 = vmul.f32 %v930, 1.442695
        %v934 = vpow.pop %v933
        %v935 = vsel %vm608, %v932, 0.0
        %936 = vadd.xlane.f32.xlu0 %v935
        %v937 = vpop.xlane.xlu0 %936
        %v938 = vsel %vm608, %v934, 0.0
        %939 = vadd.xlane.f32.xlu0 %v938
        %v940 = vpop.xlane.xlu0 %939
        %v941 = vrcp.pop %v937
        %v942 = vrcp.pop %v940
        %v943 = vmul.f32 %v932, %v941
        %v944 = vmul.f32 %v934, %v942
        %945 = vrot.lane.b32.xlu0 %v532, 64
        %v946 = vpop.permute.xlu0 %945
        %v949 = vsel %vm608, %v943, 0
        %951 = vmatpush.msra.mxu0 0.0
        %952 = vmatpush.msra.mxu0 0.0
        %953 = vmatpush.msra.mxu0 0.0
        %954 = vmatpush.msra.mxu0 0.0
        %955 = vmatpush.msra.mxu0 0.0
        %956 = vmatpush.msra.mxu0 0.0
        %957 = vmatpush.msra.mxu0 0.0
        %958 = vmatpush.msra.mxu0 0.0
        %959 = vmatpush.msra.mxu0 0.0
        %960 = vmatpush.msra.mxu0 0.0
        %961 = vmatpush.msra.mxu0 0.0
        %962 = vmatpush.msra.mxu0 0.0
        %963 = vmatpush.msra.mxu0 0.0
        %964 = vmatpush.msra.mxu0 0.0
        %965 = vmatpush.msra.mxu0 0.0
        %966 = vmatpush.msra.mxu0 %v946
        %967 = vmatmul.f32.gmra.mxu0 %v949
        %v968 = vpop.f32.mrf.mxu0
        %v969 = vadd.f32 0.0, %v968
        %970 = vdwg.mxu0
        %971 = vrot.lane.b32.xlu0 %v535, 64
        %v972 = vpop.permute.xlu0 %971
        %v975 = vsel %vm608, %v944, 0
        %977 = vmatpush.msra.mxu0 0.0
        %978 = vmatpush.msra.mxu0 0.0
        %979 = vmatpush.msra.mxu0 0.0
        %980 = vmatpush.msra.mxu0 0.0
        %981 = vmatpush.msra.mxu0 0.0
        %982 = vmatpush.msra.mxu0 0.0
        %983 = vmatpush.msra.mxu0 0.0
        %984 = vmatpush.msra.mxu0 0.0
        %985 = vmatpush.msra.mxu0 0.0
        %986 = vmatpush.msra.mxu0 0.0
        %987 = vmatpush.msra.mxu0 0.0
        %988 = vmatpush.msra.mxu0 0.0
        %989 = vmatpush.msra.mxu0 0.0
        %990 = vmatpush.msra.mxu0 0.0
        %991 = vmatpush.msra.mxu0 0.0
        %992 = vmatpush.msra.mxu0 %v972
        %993 = vmatmul.f32.gmra.mxu0 %v975
        %v994 = vpop.f32.mrf.mxu0
        %v995 = vadd.f32 0.0, %v994
        %996 = vdwg.mxu0
        %v998 = vsel %vm555, %v969, 0
        %v1001 = vsel %vm555, %v995, 0
        %1003 = vmatpush.msra.mxu0 0.0
        %1004 = vmatpush.msra.mxu0 0.0
        %1005 = vmatpush.msra.mxu0 0.0
        %1006 = vmatpush.msra.mxu0 0.0
        %1007 = vmatpush.msra.mxu0 0.0
        %1008 = vmatpush.msra.mxu0 0.0
        %1009 = vmatpush.msra.mxu0 0.0
        %1010 = vmatpush.msra.mxu0 0.0
        %1011 = vmatpush.msra.mxu0 0.0
        %1012 = vmatpush.msra.mxu0 0.0
        %1013 = vmatpush.msra.mxu0 0.0
        %1014 = vmatpush.msra.mxu0 0.0
        %1015 = vmatpush.msra.mxu0 %v548
        %1016 = vmatpush.msra.mxu0 %v547
        %1017 = vmatpush.msra.mxu0 %v546
        %1018 = vmatpush.msra.mxu0 %v545
        %1019 = vmatmul.f32.gmra.mxu0 %v998
        %v1020 = vpop.f32.mrf.mxu0
        %v1021 = vadd.f32 0.0, %v1020
        %1022 = vmatmul.f32.gmra.mxu0 %v1001
        %v1023 = vpop.f32.mrf.mxu0
        %v1024 = vadd.f32 0.0, %v1023
        %1025 = vdwg.mxu0
        %v1026 = vadd.f32 %v862, %v1021
        %v1027 = vadd.f32 %v865, %v1024
        %1028 = vrot.lane.b32.xlu0 %v553, 32
        %v1029 = vpop.permute.xlu0 %1028
        %1030 = vrot.lane.b32.xlu0 %v509, 32
        %v1031 = vpop.permute.xlu0 %1030
        %v1032 = vsel %vm555, %v1029, 0
        %v1034 = vsel %vm555, %v1031, 0
        %1036 = vmatpush.xpose.msra.mxu0 0.0
        %1037 = vmatpush.xpose.msra.mxu0 0.0
        %1038 = vmatpush.xpose.msra.mxu0 0.0
        %1039 = vmatpush.xpose.msra.mxu0 0.0
        %1040 = vmatpush.xpose.msra.mxu0 0.0
        %1041 = vmatpush.xpose.msra.mxu0 0.0
        %1042 = vmatpush.xpose.msra.mxu0 0.0
        %1043 = vmatpush.xpose.msra.mxu0 0.0
        %1044 = vmatpush.xpose.msra.mxu0 0.0
        %1045 = vmatpush.xpose.msra.mxu0 0.0
        %1046 = vmatpush.xpose.msra.mxu0 0.0
        %1047 = vmatpush.xpose.msra.mxu0 0.0
        %1048 = vmatpush.xpose.msra.mxu0 0.0
        %1049 = vmatpush.xpose.msra.mxu0 0.0
        %1050 = vmatpush.xpose.msra.mxu0 0.0
        %1051 = vmatpush.xpose.msra.mxu0 %v1034
        %1052 = vmatmul.f32.gmra.mxu0 %v1032
        %v1053 = vpop.f32.mrf.mxu0
        %v1054 = vadd.f32 0.0, %v1053
        %1055 = vdwg.mxu0
        %1056 = vrot.lane.b32.xlu0 %v554, 32
        %v1057 = vpop.permute.xlu0 %1056
        %1058 = vrot.lane.b32.xlu0 %v512, 32
        %v1059 = vpop.permute.xlu0 %1058
        %v1060 = vsel %vm555, %v1057, 0
        %v1062 = vsel %vm555, %v1059, 0
        %1064 = vmatpush.xpose.msra.mxu0 0.0
        %1065 = vmatpush.xpose.msra.mxu0 0.0
        %1066 = vmatpush.xpose.msra.mxu0 0.0
        %1067 = vmatpush.xpose.msra.mxu0 0.0
        %1068 = vmatpush.xpose.msra.mxu0 0.0
        %1069 = vmatpush.xpose.msra.mxu0 0.0
        %1070 = vmatpush.xpose.msra.mxu0 0.0
        %1071 = vmatpush.xpose.msra.mxu0 0.0
        %1072 = vmatpush.xpose.msra.mxu0 0.0
        %1073 = vmatpush.xpose.msra.mxu0 0.0
        %1074 = vmatpush.xpose.msra.mxu0 0.0
        %1075 = vmatpush.xpose.msra.mxu0 0.0
        %1076 = vmatpush.xpose.msra.mxu0 0.0
        %1077 = vmatpush.xpose.msra.mxu0 0.0
        %1078 = vmatpush.xpose.msra.mxu0 0.0
        %1079 = vmatpush.xpose.msra.mxu0 %v1062
        %1080 = vmatmul.f32.gmra.mxu0 %v1060
        %v1081 = vpop.f32.mrf.mxu0
        %v1082 = vadd.f32 0.0, %v1081
        %1083 = vdwg.mxu0
        %v1084 = vsel %vm608, %v1054, -inf
        %1085 = vmax.xlane.f32.xlu0 %v1084
        %v1086 = vpop.xlane.xlu0 %1085
        %v1087 = vsel %vm608, %v1082, -inf
        %1088 = vmax.xlane.f32.xlu0 %v1087
        %v1089 = vpop.xlane.xlu0 %1088
        %v1090 = vsub.f32 %v1054, %v1086
        %v1091 = vsub.f32 %v1082, %v1089
        %v1092 = vmul.f32 %v1090, 1.442695
        %v1093 = vpow.pop %v1092
        %v1094 = vmul.f32 %v1091, 1.442695
        %v1095 = vpow.pop %v1094
        %v1096 = vsel %vm608, %v1093, 0.0
        %1097 = vadd.xlane.f32.xlu0 %v1096
        %v1098 = vpop.xlane.xlu0 %1097
        %v1099 = vsel %vm608, %v1095, 0.0
        %1100 = vadd.xlane.f32.xlu0 %v1099
        %v1101 = vpop.xlane.xlu0 %1100
        %v1102 = vrcp.pop %v1098
        %v1103 = vrcp.pop %v1101
        %v1104 = vmul.f32 %v1093, %v1102
        %v1105 = vmul.f32 %v1095, %v1103
        %1106 = vrot.lane.b32.xlu0 %v532, 32
        %v1107 = vpop.permute.xlu0 %1106
        %v1110 = vsel %vm608, %v1104, 0
        %1112 = vmatpush.msra.mxu0 0.0
        %1113 = vmatpush.msra.mxu0 0.0
        %1114 = vmatpush.msra.mxu0 0.0
        %1115 = vmatpush.msra.mxu0 0.0
        %1116 = vmatpush.msra.mxu0 0.0
        %1117 = vmatpush.msra.mxu0 0.0
        %1118 = vmatpush.msra.mxu0 0.0
        %1119 = vmatpush.msra.mxu0 0.0
        %1120 = vmatpush.msra.mxu0 0.0
        %1121 = vmatpush.msra.mxu0 0.0
        %1122 = vmatpush.msra.mxu0 0.0
        %1123 = vmatpush.msra.mxu0 0.0
        %1124 = vmatpush.msra.mxu0 0.0
        %1125 = vmatpush.msra.mxu0 0.0
        %1126 = vmatpush.msra.mxu0 0.0
        %1127 = vmatpush.msra.mxu0 %v1107
        %1128 = vmatmul.f32.gmra.mxu0 %v1110
        %v1129 = vpop.f32.mrf.mxu0
        %v1130 = vadd.f32 0.0, %v1129
        %1131 = vdwg.mxu0
        %1132 = vrot.lane.b32.xlu0 %v535, 32
        %v1133 = vpop.permute.xlu0 %1132
        %v1136 = vsel %vm608, %v1105, 0
        %1138 = vmatpush.msra.mxu0 0.0
        %1139 = vmatpush.msra.mxu0 0.0
        %1140 = vmatpush.msra.mxu0 0.0
        %1141 = vmatpush.msra.mxu0 0.0
        %1142 = vmatpush.msra.mxu0 0.0
        %1143 = vmatpush.msra.mxu0 0.0
        %1144 = vmatpush.msra.mxu0 0.0
        %1145 = vmatpush.msra.mxu0 0.0
        %1146 = vmatpush.msra.mxu0 0.0
        %1147 = vmatpush.msra.mxu0 0.0
        %1148 = vmatpush.msra.mxu0 0.0
        %1149 = vmatpush.msra.mxu0 0.0
        %1150 = vmatpush.msra.mxu0 0.0
        %1151 = vmatpush.msra.mxu0 0.0
        %1152 = vmatpush.msra.mxu0 0.0
        %1153 = vmatpush.msra.mxu0 %v1133
        %1154 = vmatmul.f32.gmra.mxu0 %v1136
        %v1155 = vpop.f32.mrf.mxu0
        %v1156 = vadd.f32 0.0, %v1155
        %1157 = vdwg.mxu0
        %v1159 = vsel %vm555, %v1130, 0
        %v1162 = vsel %vm555, %v1156, 0
        %1164 = vmatpush.msra.mxu0 0.0
        %1165 = vmatpush.msra.mxu0 0.0
        %1166 = vmatpush.msra.mxu0 0.0
        %1167 = vmatpush.msra.mxu0 0.0
        %1168 = vmatpush.msra.mxu0 0.0
        %1169 = vmatpush.msra.mxu0 0.0
        %1170 = vmatpush.msra.mxu0 0.0
        %1171 = vmatpush.msra.mxu0 0.0
        %1172 = vmatpush.msra.mxu0 0.0
        %1173 = vmatpush.msra.mxu0 0.0
        %1174 = vmatpush.msra.mxu0 0.0
        %1175 = vmatpush.msra.mxu0 0.0
        %1176 = vmatpush.msra.mxu0 %v552
        %1177 = vmatpush.msra.mxu0 %v551
        %1178 = vmatpush.msra.mxu0 %v550
        %1179 = vmatpush.msra.mxu0 %v549
        %1180 = vmatmul.f32.gmra.mxu0 %v1159
        %v1181 = vpop.f32.mrf.mxu0
        %v1182 = vadd.f32 0.0, %v1181
        %1183 = vmatmul.f32.gmra.mxu0 %v1162
        %v1184 = vpop.f32.mrf.mxu0
        %v1185 = vadd.f32 0.0, %v1184
        %1186 = vdwg.mxu0
        %v1187 = vadd.f32 %v1026, %v1182
        %v1188 = vadd.f32 %v1027, %v1185
        %v1189 = vperm.slane %v411, 0
        %v1190 = vadd.f32 %v1187, %v1189
        %v1191 = vadd.f32 %v1188, %v1189
        %v1192 = vadd.f32 %v409, %v1190
        %v1193 = vadd.f32 %v410, %v1191
        %1194 = vadd.xlane.f32.xlu0 %v1192
        %v1195 = vpop.xlane.xlu0 %1194
        %1196 = vadd.xlane.f32.xlu0 %v1193
        %v1197 = vpop.xlane.xlu0 %1196
        %v1198 = vrcp.pop 128.0
        %v1199 = vmul.f32 128.0, %v1198
        %v1200 = vsub.f32 1.0, %v1199
        %v1201 = vmul.f32 %v1198, %v1200
        %v1202 = vadd.f32 %v1198, %v1201
        %vm1203 = vweird.f32 %v1198
        %v1204 = vsel %vm1203, %v1198, %v1202
        %v1205 = vmul.f32 %v1195, %v1204
        %v1206 = vmul.f32 %v1197, %v1204
        %v1207 = vsub.f32 %v1192, %v1205
        %v1208 = vsub.f32 %v1193, %v1206
        %v1209 = vmul.f32 %v1207, %v1207
        %v1210 = vmul.f32 %v1208, %v1208
        %1211 = vadd.xlane.f32.xlu0 %v1209
        %v1212 = vpop.xlane.xlu0 %1211
        %1213 = vadd.xlane.f32.xlu0 %v1210
        %v1214 = vpop.xlane.xlu0 %1213
        %v1215 = vmul.f32 %v1212, %v1204
        %v1216 = vmul.f32 %v1214, %v1204
        %v1217 = vadd.f32 %v1215, 1e-05
        %v1218 = vadd.f32 %v1216, 1e-05
        %v1219 = vrsqrt.pop %v1217
        %v1220 = vmul.f32 %v1219, %v1217
        %v1221 = vmul.f32 %v1220, %v1219
        %v1222 = vmul.f32 0.5, %v1221
        %v1223 = vsub.f32 1.5, %v1222
        %v1224 = vmul.f32 %v1219, %v1223
        %vm1225 = vweird.f32 %v1217
        %vm1226 = vweird.f32 %v1219
        %vm1227 = vmor %vm1225, %vm1226
        %v1228 = vsel %vm1227, %v1219, %v1224
        %v1229 = vrsqrt.pop %v1218
        %v1230 = vmul.f32 %v1229, %v1218
        %v1231 = vmul.f32 %v1230, %v1229
        %v1232 = vmul.f32 0.5, %v1231
        %v1233 = vsub.f32 1.5, %v1232
        %v1234 = vmul.f32 %v1229, %v1233
        %vm1235 = vweird.f32 %v1218
        %vm1236 = vweird.f32 %v1229
        %vm1237 = vmor %vm1235, %vm1236
        %v1238 = vsel %vm1237, %v1229, %v1234
        %v1239 = vmul.f32 %v1207, %v1228
        %v1240 = vmul.f32 %v1208, %v1238
        %v1241 = vperm.slane %v411, 1
        %v1242 = vmul.f32 %v1239, %v1241
        %v1243 = vmul.f32 %v1240, %v1241
        %v1244 = vperm.slane %v411, 2
        %v1245 = vadd.f32 %v1242, %v1244
        %v1246 = vadd.f32 %v1243, %v1244
        %v1247 = vld [vmem:[#allocation8] sm:$0xff]
        %v1248 = vld [vmem:[#allocation8 + $0x8] sm:$0xff]
        %v1249 = vld [vmem:[#allocation8 + $0x10] sm:$0xff]
        %v1250 = vld [vmem:[#allocation8 + $0x18] sm:$0xff]
        %v1251 = vld [vmem:[#allocation8 + $0x20] sm:$0xff]
        %v1252 = vld [vmem:[#allocation8 + $0x28] sm:$0xff]
        %v1253 = vld [vmem:[#allocation8 + $0x30] sm:$0xff]
        %v1254 = vld [vmem:[#allocation8 + $0x38] sm:$0xff]
        %v1255 = vld [vmem:[#allocation8 + $0x40] sm:$0xff]
        %v1256 = vld [vmem:[#allocation8 + $0x48] sm:$0xff]
        %v1257 = vld [vmem:[#allocation8 + $0x50] sm:$0xff]
        %v1258 = vld [vmem:[#allocation8 + $0x58] sm:$0xff]
        %v1259 = vld [vmem:[#allocation8 + $0x60] sm:$0xff]
        %v1260 = vld [vmem:[#allocation8 + $0x68] sm:$0xff]
        %v1261 = vld [vmem:[#allocation8 + $0x70] sm:$0xff]
        %v1262 = vld [vmem:[#allocation8 + $0x78] sm:$0xff]
        %v1263 = vld [vmem:[#allocation8 + $0x80] sm:$0xff]
        %v1264 = vld [vmem:[#allocation8 + $0x88] sm:$0xff]
        %v1265 = vld [vmem:[#allocation8 + $0x90] sm:$0xff]
        %v1266 = vld [vmem:[#allocation8 + $0x98] sm:$0xff]
        %v1267 = vld [vmem:[#allocation8 + $0xa0] sm:$0xff]
        %v1268 = vld [vmem:[#allocation8 + $0xa8] sm:$0xff]
        %v1269 = vld [vmem:[#allocation8 + $0xb0] sm:$0xff]
        %v1270 = vld [vmem:[#allocation8 + $0xb8] sm:$0xff]
        %v1271 = vld [vmem:[#allocation8 + $0xc0] sm:$0xff]
        %v1272 = vld [vmem:[#allocation8 + $0xc8] sm:$0xff]
        %v1273 = vld [vmem:[#allocation8 + $0xd0] sm:$0xff]
        %v1274 = vld [vmem:[#allocation8 + $0xd8] sm:$0xff]
        %v1275 = vld [vmem:[#allocation8 + $0xe0] sm:$0xff]
        %v1276 = vld [vmem:[#allocation8 + $0xe8] sm:$0xff]
        %v1277 = vld [vmem:[#allocation8 + $0xf0] sm:$0xff]
        %v1278 = vld [vmem:[#allocation8 + $0xf8] sm:$0xff]
        %v1279 = vld [vmem:[%s6] sm:$0x3]
        %v1281 = vperm.slane %v1279, 0
        %v1282 = vperm.slane %v1279, 1
        %1285 = vmatpush.msra.mxu0 %v1277
        %1286 = vmatpush.msra.mxu0 %v1275
        %1287 = vmatpush.msra.mxu0 %v1273
        %1288 = vmatpush.msra.mxu0 %v1271
        %1289 = vmatpush.msra.mxu0 %v1269
        %1290 = vmatpush.msra.mxu0 %v1267
        %1291 = vmatpush.msra.mxu0 %v1265
        %1292 = vmatpush.msra.mxu0 %v1263
        %1293 = vmatpush.msra.mxu0 %v1261
        %1294 = vmatpush.msra.mxu0 %v1259
        %1295 = vmatpush.msra.mxu0 %v1257
        %1296 = vmatpush.msra.mxu0 %v1255
        %1297 = vmatpush.msra.mxu0 %v1253
        %1298 = vmatpush.msra.mxu0 %v1251
        %1299 = vmatpush.msra.mxu0 %v1249
        %1300 = vmatpush.msra.mxu0 %v1247
        %1301 = vmatmul.f32.gmra.mxu0 %v1245
        %v1302 = vpop.f32.mrf.mxu0
        %v1303 = vadd.f32 %v1281, %v1302
        %1304 = vmatmul.f32.gmra.mxu0 %v1246
        %v1305 = vpop.f32.mrf.mxu0
        %v1306 = vadd.f32 %v1281, %v1305
        %1307 = vdwg.mxu0
        %1308 = vmatpush.msra.mxu0 %v1278
        %1309 = vmatpush.msra.mxu0 %v1276
        %1310 = vmatpush.msra.mxu0 %v1274
        %1311 = vmatpush.msra.mxu0 %v1272
        %1312 = vmatpush.msra.mxu0 %v1270
        %1313 = vmatpush.msra.mxu0 %v1268
        %1314 = vmatpush.msra.mxu0 %v1266
        %1315 = vmatpush.msra.mxu0 %v1264
        %1316 = vmatpush.msra.mxu0 %v1262
        %1317 = vmatpush.msra.mxu0 %v1260
        %1318 = vmatpush.msra.mxu0 %v1258
        %1319 = vmatpush.msra.mxu0 %v1256
        %1320 = vmatpush.msra.mxu0 %v1254
        %1321 = vmatpush.msra.mxu0 %v1252
        %1322 = vmatpush.msra.mxu0 %v1250
        %1323 = vmatpush.msra.mxu0 %v1248
        %1324 = vmatmul.f32.gmra.mxu0 %v1245
        %v1325 = vpop.f32.mrf.mxu0
        %v1326 = vadd.f32 %v1282, %v1325
        %1327 = vmatmul.f32.gmra.mxu0 %v1246
        %v1328 = vpop.f32.mrf.mxu0
        %v1329 = vadd.f32 %v1282, %v1328
        %1330 = vdwg.mxu0
        %v1331 = vmax.f32 %v1303, 0.0
        %v1332 = vmax.f32 %v1326, 0.0
        %v1333 = vmax.f32 %v1306, 0.0
        %v1334 = vmax.f32 %v1329, 0.0
        %v1335 = vld [vmem:[#allocation10] sm:$0xff]
        %v1336 = vld [vmem:[#allocation10 + $0x8] sm:$0xff]
        %v1337 = vld [vmem:[#allocation10 + $0x10] sm:$0xff]
        %v1338 = vld [vmem:[#allocation10 + $0x18] sm:$0xff]
        %v1339 = vld [vmem:[#allocation10 + $0x20] sm:$0xff]
        %v1340 = vld [vmem:[#allocation10 + $0x28] sm:$0xff]
        %v1341 = vld [vmem:[#allocation10 + $0x30] sm:$0xff]
        %v1342 = vld [vmem:[#allocation10 + $0x38] sm:$0xff]
        %v1343 = vld [vmem:[#allocation10 + $0x40] sm:$0xff]
        %v1344 = vld [vmem:[#allocation10 + $0x48] sm:$0xff]
        %v1345 = vld [vmem:[#allocation10 + $0x50] sm:$0xff]
        %v1346 = vld [vmem:[#allocation10 + $0x58] sm:$0xff]
        %v1347 = vld [vmem:[#allocation10 + $0x60] sm:$0xff]
        %v1348 = vld [vmem:[#allocation10 + $0x68] sm:$0xff]
        %v1349 = vld [vmem:[#allocation10 + $0x70] sm:$0xff]
        %v1350 = vld [vmem:[#allocation10 + $0x78] sm:$0xff]
        %v1351 = vld [vmem:[#allocation10 + $0x80] sm:$0xff]
        %v1352 = vld [vmem:[#allocation10 + $0x88] sm:$0xff]
        %v1353 = vld [vmem:[#allocation10 + $0x90] sm:$0xff]
        %v1354 = vld [vmem:[#allocation10 + $0x98] sm:$0xff]
        %v1355 = vld [vmem:[#allocation10 + $0xa0] sm:$0xff]
        %v1356 = vld [vmem:[#allocation10 + $0xa8] sm:$0xff]
        %v1357 = vld [vmem:[#allocation10 + $0xb0] sm:$0xff]
        %v1358 = vld [vmem:[#allocation10 + $0xb8] sm:$0xff]
        %v1359 = vld [vmem:[#allocation10 + $0xc0] sm:$0xff]
        %v1360 = vld [vmem:[#allocation10 + $0xc8] sm:$0xff]
        %v1361 = vld [vmem:[#allocation10 + $0xd0] sm:$0xff]
        %v1362 = vld [vmem:[#allocation10 + $0xd8] sm:$0xff]
        %v1363 = vld [vmem:[#allocation10 + $0xe0] sm:$0xff]
        %v1364 = vld [vmem:[#allocation10 + $0xe8] sm:$0xff]
        %v1365 = vld [vmem:[#allocation10 + $0xf0] sm:$0xff]
        %v1366 = vld [vmem:[#allocation10 + $0xf8] sm:$0xff]
        %v1367 = vperm.slane %v411, 3
        %1368 = vmatpush.msra.mxu0 %v1350
        %1369 = vmatpush.msra.mxu0 %v1349
        %1370 = vmatpush.msra.mxu0 %v1348
        %1371 = vmatpush.msra.mxu0 %v1347
        %1372 = vmatpush.msra.mxu0 %v1346
        %1373 = vmatpush.msra.mxu0 %v1345
        %1374 = vmatpush.msra.mxu0 %v1344
        %1375 = vmatpush.msra.mxu0 %v1343
        %1376 = vmatpush.msra.mxu0 %v1342
        %1377 = vmatpush.msra.mxu0 %v1341
        %1378 = vmatpush.msra.mxu0 %v1340
        %1379 = vmatpush.msra.mxu0 %v1339
        %1380 = vmatpush.msra.mxu0 %v1338
        %1381 = vmatpush.msra.mxu0 %v1337
        %1382 = vmatpush.msra.mxu0 %v1336
        %1383 = vmatpush.msra.mxu0 %v1335
        %1384 = vmatmul.f32.gmra.mxu0 %v1331
        %v1385 = vpop.f32.mrf.mxu0
        %v1386 = vadd.f32 %v1367, %v1385
        %1387 = vmatmul.f32.gmra.mxu0 %v1333
        %v1388 = vpop.f32.mrf.mxu0
        %v1389 = vadd.f32 %v1367, %v1388
        %1390 = vdwg.mxu0
        %1391 = vmatpush.msra.mxu0 %v1366
        %1392 = vmatpush.msra.mxu0 %v1365
        %1393 = vmatpush.msra.mxu0 %v1364
        %1394 = vmatpush.msra.mxu0 %v1363
        %1395 = vmatpush.msra.mxu0 %v1362
        %1396 = vmatpush.msra.mxu0 %v1361
        %1397 = vmatpush.msra.mxu0 %v1360
        %1398 = vmatpush.msra.mxu0 %v1359
        %1399 = vmatpush.msra.mxu0 %v1358
        %1400 = vmatpush.msra.mxu0 %v1357
        %1401 = vmatpush.msra.mxu0 %v1356
        %1402 = vmatpush.msra.mxu0 %v1355
        %1403 = vmatpush.msra.mxu0 %v1354
        %1404 = vmatpush.msra.mxu0 %v1353
        %1405 = vmatpush.msra.mxu0 %v1352
        %1406 = vmatpush.msra.mxu0 %v1351
        %1407 = vmatmul.f32.gmra.mxu0 %v1332
        %v1408 = vpop.f32.mrf.mxu0
        %v1409 = vadd.f32 %v1386, %v1408
        %1410 = vmatmul.f32.gmra.mxu0 %v1334
        %v1411 = vpop.f32.mrf.mxu0
        %v1412 = vadd.f32 %v1389, %v1411
        %1413 = vdwg.mxu0
        %v1414 = vadd.f32 %v1245, %v1409
        %v1415 = vadd.f32 %v1246, %v1412
        %1416 = vadd.xlane.f32.xlu0 %v1414
        %v1417 = vpop.xlane.xlu0 %1416
        %1418 = vadd.xlane.f32.xlu0 %v1415
        %v1419 = vpop.xlane.xlu0 %1418
        %v1420 = vmul.f32 %v1417, %v1204
        %v1421 = vmul.f32 %v1419, %v1204
        %v1422 = vsub.f32 %v1414, %v1420
        %v1423 = vsub.f32 %v1415, %v1421
        %v1424 = vmul.f32 %v1422, %v1422
        %v1425 = vmul.f32 %v1423, %v1423
        %1426 = vadd.xlane.f32.xlu0 %v1424
        %v1427 = vpop.xlane.xlu0 %1426
        %1428 = vadd.xlane.f32.xlu0 %v1425
        %v1429 = vpop.xlane.xlu0 %1428
        %v1430 = vmul.f32 %v1427, %v1204
        %v1431 = vmul.f32 %v1429, %v1204
        %v1432 = vadd.f32 %v1430, 1e-05
        %v1433 = vadd.f32 %v1431, 1e-05
        %v1434 = vrsqrt.pop %v1432
        %v1435 = vmul.f32 %v1434, %v1432
        %v1436 = vmul.f32 %v1435, %v1434
        %v1437 = vmul.f32 0.5, %v1436
        %v1438 = vsub.f32 1.5, %v1437
        %v1439 = vmul.f32 %v1434, %v1438
        %vm1440 = vweird.f32 %v1432
        %vm1441 = vweird.f32 %v1434
        %vm1442 = vmor %vm1440, %vm1441
        %v1443 = vsel %vm1442, %v1434, %v1439
        %v1444 = vrsqrt.pop %v1433
        %v1445 = vmul.f32 %v1444, %v1433
        %v1446 = vmul.f32 %v1445, %v1444
        %v1447 = vmul.f32 0.5, %v1446
        %v1448 = vsub.f32 1.5, %v1447
        %v1449 = vmul.f32 %v1444, %v1448
        %vm1450 = vweird.f32 %v1433
        %vm1451 = vweird.f32 %v1444
        %vm1452 = vmor %vm1450, %vm1451
        %v1453 = vsel %vm1452, %v1444, %v1449
        %v1454 = vmul.f32 %v1422, %v1443
        %v1455 = vmul.f32 %v1423, %v1453
        %v1456 = vperm.slane %v411, 4
        %v1457 = vmul.f32 %v1454, %v1456
        %v1458 = vmul.f32 %v1455, %v1456
        %v1459 = vperm.slane %v411, 5
        %v1460 = vadd.f32 %v1457, %v1459
        %v1461 = vadd.f32 %v1458, %v1459
        %1462 = vst [vmem:[%s406] sm:$0xff] %v1460
        %1463 = vst [vmem:[%s406 + $0x8] sm:$0xff] %v1461
        %s1464 = sand.u32 %s209, 1
        %s1465 = scalar_lea.sflag [#allocation4], %s1464
        %s1466 = sand.u32 %s209, 1
        %s1467 = smul.addr %s1466, 16
        %s1468 = scalar_lea.vmem [#allocation13], %s1467
        // Predicated region
        $region77: #{tpu_custom_call.1} parent=51 // pred_check
          %p1469 = pneg %p219
        $region78: #{tpu_custom_call.1} parent=51 // pred_check_branch
          %1471 = sbr.rel (%p1469) target = $region80
        $region79: #{tpu_custom_call.1} parent=51 // pred_region
          %s1472 = smul.u32 2, %s28
          %1474 = vsyncadd %s1465, 0
          %s1475 = smul.addr %s1472, 8
          %s1476 = scalar_lea.hbm %s8, %s1475
          %s1477 = sshll.u32 %s1468, 4
          %s1478 = int_to_ptr.vmem [resolvable:$true] %s1477
          %s1479 = sshll.u32 %s1476, 4
          %s1480 = int_to_ptr.hbm [resolvable:$true] %s1479
          %1485 = dma.vmem_to_hbm [thread:$0]  %s1478, 256, %s1480, %s1465, 128, 128, 8
        $region80: #{tpu_custom_call.1} parent=51 // pred_fallthru
          _
      $region52: #{tpu_custom_call.1} parent=5 // pred_fallthru
        _
      %p1486 = scmp.le.s32.totalorder 2, %s23
      // Predicated region
      $region81: #{tpu_custom_call.1} parent=5 // pred_check
        %p1487 = pneg %p1486
      $region82: #{tpu_custom_call.1} parent=5 // pred_check_branch
        %1489 = sbr.rel (%p1487) target = $region84
      $region83: #{tpu_custom_call.1} parent=5 // pred_region
        %s1490 = ssub.s32 %s23, 2
        // Predicated region
        $region85: #{tpu_custom_call.1} parent=83 // pred_check
          %p1491 = pneg %p225
        $region86: #{tpu_custom_call.1} parent=83 // pred_check_branch
          %1493 = sbr.rel (%p1491) target = $region88
        $region87: #{tpu_custom_call.1} parent=83 // pred_region
          %s1494 = sand.u32 %s210, 1
          %s1495 = scalar_lea.sflag [#allocation4], %s1494
          %s1496 = sand.u32 %s210, 1
          %s1497 = smul.addr %s1496, 16
          %s1498 = scalar_lea.vmem [#allocation13], %s1497
          %1500 = dma.done %s1495, 256
        $region88: #{tpu_custom_call.1} parent=83 // pred_fallthru
          _
      $region84: #{tpu_custom_call.1} parent=5 // pred_fallthru
        _
    $region6: #{tpu_custom_call.1} parent=1 // loop_footer
      %s27 = sadd.s32 1, %s23
    $region7: #{tpu_custom_call.1} parent=1 // loop_footer_branch
      %22 = sbr.rel target = $region3
    $region8: #{tpu_custom_call.1} parent=1 // loop_exit
      _
    %1501 = vsyncpa [#allocation3], 1
    %s1502 = scalar_lea.sflag [#allocation3], 1
    %1503 = vsyncpa %s1502, 1
    %1504 = vsyncpa [#allocation6], 1
    %1505 = vsyncpa [#allocation9], 1
    %1506 = vsyncpa [#allocation12], 1
    %1507 = vsyncpa [#allocation4], 1
    %s1508 = scalar_lea.sflag [#allocation4], 1
    %1509 = vsyncpa %s1508, 1

</llo_original>
